<compile_context>
chip_gen: v7x
topology: tpu7x:2x2x1
jax: 0.10.0
libtpu: 0.0.40
codegen_flags: <defaults>
</compile_context>

<pallas_src>
import jax
import jax.numpy as jnp
from jax import lax
from jax.experimental import pallas as pl
from jax.experimental.pallas import tpu as pltpu


def _round_up(x, m):
    return (x + m - 1) // m * m


def bigru_chunk_kernel(gi_ref, m_ref, whh_ref, bhn_ref, h0_ref,
                       out_ref, hid_ref, h_scr):
    """One (direction, time-chunk) grid step of the bidirectional GRU.

    Ref shapes (direction block dim squeezed away):
      gi_ref : (TC, Bp, 3*Hp) f32/bf16  precomputed x@W_ih^T + folded biases
      m_ref  : (TC, Bp, 1)    f32       validity mask (pack_padded semantics)
      whh_ref: (Hp, 3*Hp)     bf16/f32  MXU operand (gate-major, per-gate padded)
      bhn_ref: (1, Hp)        f32       b_hn (only bias left inside the loop)
      h0_ref : (Bp, Hp)       f32       initial hidden for this direction
      out_ref: (TC, Bp, Hp)   f32       per-direction output slab (no RMW)
      hid_ref: (Bp, Hp)       f32       final hidden for this direction
      h_scr  : (Bp, Hp)       f32       hidden state carried across time chunks
    """
    t_chunk = pl.program_id(1)
    n_chunks = pl.num_programs(1)
    n_steps, b_p, h_p = out_ref.shape

    @pl.when(t_chunk == 0)
    def _init():
        h_scr[...] = h0_ref[...]

    w_hh = whh_ref[...]                                     # hoisted out of the loop
    b_hn = jnp.broadcast_to(bhn_ref[...], (b_p, h_p))       # broadcast once, not per step

    def step(s, h):
        gi = gi_ref[pl.ds(s, 1)][0].astype(jnp.float32)     # (Bp, 3Hp), gate math in f32
        # Only matmul on the serial critical path: h @ W_hh (low-prec ops, f32 acc).
        gh = jnp.dot(h.astype(w_hh.dtype), w_hh,
                     preferred_element_type=jnp.float32)    # (Bp, 3Hp)
        r = jax.nn.sigmoid(gi[:, :h_p] + gh[:, :h_p])
        z = jax.nn.sigmoid(gi[:, h_p:2 * h_p] + gh[:, h_p:2 * h_p])
        n = jnp.tanh(gi[:, 2 * h_p:] + r * (gh[:, 2 * h_p:] + b_hn))
        h_new = (1.0 - z) * n + z * h
        m = m_ref[pl.ds(s, 1)][0]                           # (Bp, 1) in {0, 1}
        out_ref[pl.ds(s, 1)] = (m * h_new)[None]            # zero past each seq length
        return m * h_new + (1.0 - m) * h                    # freeze state past length

    h_last = lax.fori_loop(0, n_steps, step, h_scr[...], unroll=True)
    h_scr[...] = h_last

    @pl.when(t_chunk == n_chunks - 1)
    def _finalize():
        hid_ref[...] = h_last


def encoder_rnn_forward(input_seq, input_lengths, embedding, params,
                        hidden=None, *, time_chunk=8,
                        mxu_dtype=jnp.bfloat16, stream_dtype=jnp.float32):
    """input_seq: (T, B) int tokens; input_lengths: (B,) ints (PyTorch layout)."""
    T, B = input_seq.shape
    V, H = embedding.shape
    wih, whh, bih, bhh = params        # (2,3H,H), (2,3H,H), (2,1,3H), (2,1,3H)

    f32 = jnp.float32
    hi = lax.Precision.HIGHEST

    Hp = _round_up(H, 128)             # lane dim
    Bp = _round_up(B, 8)               # sublane dim
    TC = int(time_chunk)
    Tp = _round_up(max(T, 1), TC)
    nT = Tp // TC

    # ---- hoist the input GEMM out of the recurrence by fusing it into the
    # embedding table:  gi_table[d] = emb @ W_ih[d]^T + (b_ih[d] + [b_hr, b_hz, 0]).
    bhh_rz = jnp.concatenate(
        [bhh[:, :, :2 * H], jnp.zeros_like(bhh[:, :, 2 * H:])], axis=-1)
    gi_tables = jnp.einsum('vh,dgh->dvg', embedding.astype(f32),
                           wih.astype(f32), precision=hi) \
        + (bih + bhh_rz).astype(f32)                         # (2, V, 3H)

    # TODO(synk): the token gather stays in plain JAX (no cheap in-kernel gather
    # form); all sequential work runs inside the Pallas kernel.
    tokens = input_seq.astype(jnp.int32)
    gi_f = gi_tables[0][tokens]                              # (T, B, 3H)
    gi_b = gi_tables[1][tokens[::-1]]                        # time-reversed stream

    def pad_gates(g):                                        # (T,B,3H)->(Tp,Bp,3Hp)
        g = g.reshape(T, B, 3, H)
        g = jnp.pad(g, ((0, Tp - T), (0, Bp - B), (0, 0), (0, Hp - H)))
        return g.reshape(Tp, Bp, 3 * Hp).astype(stream_dtype)

    gi = jnp.stack([pad_gates(gi_f), pad_gates(gi_b)])       # (2,Tp,Bp,3Hp)

    # ---- validity masks reproducing pack_padded_sequence semantics.
    lens = jnp.zeros((Bp,), jnp.int32).at[:B].set(input_lengths.astype(jnp.int32))
    t_idx = jnp.arange(Tp)
    mask_f = t_idx[:, None] < lens[None, :]
    mask_b = (t_idx[:, None] < T) & ((T - 1 - t_idx)[:, None] < lens[None, :])
    mask = jnp.stack([mask_f, mask_b]).astype(f32)[..., None]  # (2,Tp,Bp,1)

    # ---- recurrent weights: transposed, per-gate padded to (Hp, 3Hp), MXU dtype.
    whh_t = jnp.transpose(whh, (0, 2, 1)).reshape(2, H, 3, H).astype(f32)
    whh_p = jnp.pad(whh_t, ((0, 0), (0, Hp - H), (0, 0), (0, Hp - H)))
    whh_p = whh_p.reshape(2, Hp, 3 * Hp).astype(mxu_dtype)
    bhn = jnp.pad(bhh[:, :, 2 * H:].astype(f32), ((0, 0), (0, 0), (0, Hp - H)))

    if hidden is None:
        h0 = jnp.zeros((2, Bp, Hp), f32)
    else:
        h0 = jnp.pad(hidden.astype(f32), ((0, 0), (0, Bp - B), (0, Hp - H)))

    # ---- VMEM budget: double-buffered gi/mask/out chunks + weights + carries.
    gi_item = jnp.dtype(stream_dtype).itemsize
    w_item = jnp.dtype(mxu_dtype).itemsize
    chunk_bytes = TC * Bp * (3 * Hp * gi_item + 4) + TC * Bp * Hp * 4
    fixed_bytes = Hp * 3 * Hp * w_item + 4 * (Hp + 3 * Bp * Hp)
    vmem_limit = int(min(48 * 1024 * 1024,
                         max(16 * 1024 * 1024, 4 * chunk_bytes + 2 * fixed_bytes)))

    out, hid = pl.pallas_call(
        bigru_chunk_kernel,
        out_shape=(jax.ShapeDtypeStruct((2, Tp, Bp, Hp), f32),
                   jax.ShapeDtypeStruct((2, Bp, Hp), f32)),
        grid_spec=pltpu.PrefetchScalarGridSpec(
            num_scalar_prefetch=0,
            grid=(2, nT),                                    # (direction, time-chunk)
            in_specs=[
                pl.BlockSpec((None, TC, Bp, 3 * Hp), lambda d, t: (d, t, 0, 0)),
                pl.BlockSpec((None, TC, Bp, 1), lambda d, t: (d, t, 0, 0)),
                pl.BlockSpec((None, Hp, 3 * Hp), lambda d, t: (d, 0, 0)),
                pl.BlockSpec((None, 1, Hp), lambda d, t: (d, 0, 0)),
                pl.BlockSpec((None, Bp, Hp), lambda d, t: (d, 0, 0)),
            ],
            out_specs=(
                pl.BlockSpec((None, TC, Bp, Hp), lambda d, t: (d, t, 0, 0)),
                pl.BlockSpec((None, Bp, Hp), lambda d, t: (d, 0, 0)),
            ),
            scratch_shapes=[pltpu.VMEM((Bp, Hp), f32)],
        ),
        compiler_params=pltpu.CompilerParams(
            dimension_semantics=("parallel", "arbitrary"),
            vmem_limit_bytes=vmem_limit),
    )(gi, mask, whh_p, bhn, h0)

    # fwd half + un-reversed bwd half, then un-pad (torch `[:,:,:H] + [:,:,H:]`).
    outputs = (out[0, :T] + out[1, :T][::-1])[:, :B, :H]
    hid_final = hid[:, :B, :H]
    return outputs, hid_final


def init_params(key, vocab_size, H):
    """Deterministic synthetic parameters (PyTorch GRU/Embedding shapes)."""
    k_emb, k1, k2, k3, k4 = jax.random.split(key, 5)
    emb = jax.random.normal(k_emb, (vocab_size, H), jnp.float32)   # nn.Embedding
    bound = 1.0 / (H ** 0.5)
    wih = jax.random.uniform(k1, (2, 3 * H, H), jnp.float32, -bound, bound)
    whh = jax.random.uniform(k2, (2, 3 * H, H), jnp.float32, -bound, bound)
    bih = jax.random.uniform(k3, (2, 1, 3 * H), jnp.float32, -bound, bound)
    bhh = jax.random.uniform(k4, (2, 1, 3 * H), jnp.float32, -bound, bound)
    return emb, (wih, whh, bih, bhh)


def reference_forward(input_seq, input_lengths, embedding, params, hidden=None):
    """Pure-JAX f32 reference of the same semantics (for correctness check)."""
    wih, whh, bih, bhh = params
    T, B = input_seq.shape
    H = embedding.shape[1]
    hi = lax.Precision.HIGHEST
    x = embedding[input_seq].astype(jnp.float32)
    lens = input_lengths.astype(jnp.int32).reshape(B, 1)
    if hidden is None:
        hidden = jnp.zeros((2, B, H), jnp.float32)

    def cell(x_t, h, d):
        gi = jnp.dot(x_t, wih[d].T, precision=hi) + bih[d]
        gh = jnp.dot(h, whh[d].T, precision=hi) + bhh[d]
        i_r, i_z, i_n = gi[:, :H], gi[:, H:2 * H], gi[:, 2 * H:]
        h_r, h_z, h_n = gh[:, :H], gh[:, H:2 * H], gh[:, 2 * H:]
        r = jax.nn.sigmoid(i_r + h_r)
        z = jax.nn.sigmoid(i_z + h_z)
        n = jnp.tanh(i_n + r * h_n)
        return (1.0 - z) * n + z * h

    out_f = []
    h = hidden[0]
    for t in range(T):
        h_new = cell(x[t], h, 0)
        m = t < lens
        out_f.append(jnp.where(m, h_new, 0.0))
        h = jnp.where(m, h_new, h)
    hid_f = h

    out_b = [None] * T
    h = hidden[1]
    for t in range(T - 1, -1, -1):
        h_new = cell(x[t], h, 1)
        m = t < lens
        out_b[t] = jnp.where(m, h_new, 0.0)
        h = jnp.where(m, h_new, h)
    hid_b = h

    outputs = jnp.stack(out_f) + jnp.stack(out_b)
    hid = jnp.stack([hid_f, hid_b])
    return outputs, hid


if __name__ == "__main__":
    key = jax.random.PRNGKey(0)
    vocab_size, H, T, B = 20, 32, 8, 2

    k_params, k_tok = jax.random.split(key)
    embedding, params = init_params(k_params, vocab_size, H)

    input_seq = jax.random.randint(k_tok, (T, B), 0, vocab_size, dtype=jnp.int32)
    input_lengths = jnp.array([8, 5], dtype=jnp.int32)   # sorted descending, as PyTorch requires

    ref_out, ref_hid = reference_forward(input_seq, input_lengths, embedding, params)

    # Strict-accuracy path (f32 MXU operands, f32 streams).
    out32, hid32 = encoder_rnn_forward(input_seq, input_lengths, embedding, params,
                                       mxu_dtype=jnp.float32)
    jax.block_until_ready((out32, hid32))
    assert out32.shape == (T, B, H) and hid32.shape == (2, B, H)
    assert jnp.allclose(out32, ref_out, atol=1e-3, rtol=1e-3), "f32 outputs mismatch"
    assert jnp.allclose(hid32, ref_hid, atol=1e-3, rtol=1e-3), "f32 hidden mismatch"

    # Default performance path: bf16 MXU operands, f32 accumulation/state/streams.
    outputs, hidden_out = encoder_rnn_forward(input_seq, input_lengths, embedding, params)
    jax.block_until_ready((outputs, hidden_out))
    assert outputs.shape == (T, B, H) and hidden_out.shape == (2, B, H)
    assert jnp.allclose(outputs, ref_out, atol=2e-2, rtol=2e-2), "bf16 outputs mismatch"
    assert jnp.allclose(hidden_out, ref_hid, atol=2e-2, rtol=2e-2), "bf16 hidden mismatch"

    # Bandwidth-optimized path: additionally stream the precomputed gates in bf16
    # (halves the dominant HBM read); gate math stays f32 in-kernel.
    out_bw, hid_bw = encoder_rnn_forward(input_seq, input_lengths, embedding, params,
                                         stream_dtype=jnp.bfloat16)
    jax.block_until_ready((out_bw, hid_bw))
    assert out_bw.shape == (T, B, H) and hid_bw.shape == (2, B, H)
    assert jnp.allclose(out_bw, ref_out, atol=5e-2, rtol=5e-2), "bf16-stream outputs mismatch"
    assert jnp.allclose(hid_bw, ref_hid, atol=5e-2, rtol=5e-2), "bf16-stream hidden mismatch"

    print("KERNEL_OK")
</pallas_src>

<mosaic_0001>
module attributes {stable_mosaic.version = 11 : i64} {
  func.func @bigru_chunk_kernel(%arg0: i32, %arg1: i32, %arg2: memref<1x8x8x384xf32, #tpu.memory_space<vmem>>, %arg3: memref<1x8x8x1xf32, #tpu.memory_space<vmem>>, %arg4: memref<1x128x384xf32, #tpu.memory_space<vmem>>, %arg5: memref<1x1x128xf32, #tpu.memory_space<vmem>>, %arg6: memref<1x8x128xf32, #tpu.memory_space<vmem>>, %arg7: memref<1x8x8x128xf32, #tpu.memory_space<vmem>>, %arg8: memref<1x8x128xf32, #tpu.memory_space<vmem>>, %arg9: memref<8x128xf32, #tpu.memory_space<vmem>>) attributes {dimension_semantics = [#tpu.dimension_semantics<parallel>, #tpu.dimension_semantics<arbitrary>], iteration_bounds = array<i64: 2, 1>, scalar_prefetch = 0 : i64, scratch_operands = 1 : i64, tpu.core_type = #tpu.core_type<tc>, window_params = [{transform_indices = @transform_0, window_bounds = array<i64: 1, 8, 8, 384>}, {transform_indices = @transform_1, window_bounds = array<i64: 1, 8, 8, 1>}, {transform_indices = @transform_2, window_bounds = array<i64: 1, 128, 384>}, {transform_indices = @transform_3, window_bounds = array<i64: 1, 1, 128>}, {transform_indices = @transform_4, window_bounds = array<i64: 1, 8, 128>}, {transform_indices = @transform_5, window_bounds = array<i64: 1, 8, 8, 128>}, {transform_indices = @transform_6, window_bounds = array<i64: 1, 8, 128>}]} {
    %c0_i32 = arith.constant 0 : i32
    %0 = arith.cmpi eq, %arg1, %c0_i32 : i32
    %1 = arith.extui %0 : i1 to i32
    %c0_i32_0 = arith.constant 0 : i32
    %2 = arith.cmpi ne, %1, %c0_i32_0 : i32
    scf.if %2 {
      %c0_124 = arith.constant 0 : index
      %c0_125 = arith.constant 0 : index
      %c0_126 = arith.constant 0 : index
      %414 = vector.load %arg6[%c0_124, %c0_125, %c0_126] : memref<1x8x128xf32, #tpu.memory_space<vmem>>, vector<1x8x128xf32>
      %415 = vector.shape_cast %414 : vector<1x8x128xf32> to vector<8x128xf32>
      %c0_127 = arith.constant 0 : index
      %c0_128 = arith.constant 0 : index
      %416 = vector.load %arg9[%c0_127, %c0_128] : memref<8x128xf32, #tpu.memory_space<vmem>>, vector<8x128xf32>
      tpu.vector_store %arg9[%c0_127, %c0_128], %415 {strides = array<i32>} : memref<8x128xf32, #tpu.memory_space<vmem>>, vector<8x128xf32>,
    } else {
    }
    %c0 = arith.constant 0 : index
    %c0_1 = arith.constant 0 : index
    %c0_2 = arith.constant 0 : index
    %3 = vector.load %arg4[%c0, %c0_1, %c0_2] : memref<1x128x384xf32, #tpu.memory_space<vmem>>, vector<1x128x384xf32>
    %4 = vector.shape_cast %3 : vector<1x128x384xf32> to vector<128x384xf32>
    %c0_3 = arith.constant 0 : index
    %c0_4 = arith.constant 0 : index
    %c0_5 = arith.constant 0 : index
    %5 = vector.load %arg5[%c0_3, %c0_4, %c0_5] : memref<1x1x128xf32, #tpu.memory_space<vmem>>, vector<1x1x128xf32>
    %6 = vector.shape_cast %5 : vector<1x1x128xf32> to vector<1x128xf32>
    %7 = vector.shape_cast %6 : vector<1x128xf32> to vector<1x128xf32>
    %8 = vector.broadcast %7 : vector<1x128xf32> to vector<8x128xf32>
    %c0_6 = arith.constant 0 : index
    %c0_7 = arith.constant 0 : index
    %9 = vector.load %arg9[%c0_6, %c0_7] : memref<8x128xf32, #tpu.memory_space<vmem>>, vector<8x128xf32>
    %c0_i32_8 = arith.constant 0 : i32
    %c0_9 = arith.constant 0 : index
    %10 = arith.index_cast %c0_i32_8 : i32 to index
    %c0_10 = arith.constant 0 : index
    %c0_11 = arith.constant 0 : index
    %11 = vector.load %arg2[%c0_9, %10, %c0_10, %c0_11] : memref<1x8x8x384xf32, #tpu.memory_space<vmem>>, vector<1x1x8x384xf32>
    %12 = vector.shape_cast %11 : vector<1x1x8x384xf32> to vector<1x8x384xf32>
    %13 = vector.shape_cast %12 : vector<1x8x384xf32> to vector<8x384xf32>
    %cst = arith.constant dense<0.000000e+00> : vector<8x384xf32>
    %14 = tpu.matmul %9, %4, %cst {dimension_numbers = #tpu.dot_dimension_numbers<[1], [0], [0], [1], [0, 0, 1, 1], [], []>} : vector<8x128xf32>, vector<128x384xf32>, vector<8x384xf32> -> vector<8x384xf32>
    %15 = vector.extract_strided_slice %13 {offsets = [0, 0], sizes = [8, 128], strides = [1, 1]} : vector<8x384xf32> to vector<8x128xf32>
    %16 = vector.extract_strided_slice %14 {offsets = [0, 0], sizes = [8, 128], strides = [1, 1]} : vector<8x384xf32> to vector<8x128xf32>
    %17 = arith.addf %15, %16 : vector<8x128xf32>
    %18 = arith.negf %17 : vector<8x128xf32>
    %19 = math.exp %18 : vector<8x128xf32>
    %cst_12 = arith.constant 1.000000e+00 : f32
    %20 = vector.broadcast %cst_12 : f32 to vector<8x128xf32>
    %21 = arith.addf %20, %19 : vector<8x128xf32>
    %22 = arith.divf %20, %21 : vector<8x128xf32>
    %23 = vector.extract_strided_slice %13 {offsets = [0, 128], sizes = [8, 128], strides = [1, 1]} : vector<8x384xf32> to vector<8x128xf32>
    %24 = vector.extract_strided_slice %14 {offsets = [0, 128], sizes = [8, 128], strides = [1, 1]} : vector<8x384xf32> to vector<8x128xf32>
    %25 = arith.addf %23, %24 : vector<8x128xf32>
    %26 = arith.negf %25 : vector<8x128xf32>
    %27 = math.exp %26 : vector<8x128xf32>
    %cst_13 = arith.constant 1.000000e+00 : f32
    %28 = vector.broadcast %cst_13 : f32 to vector<8x128xf32>
    %29 = arith.addf %28, %27 : vector<8x128xf32>
    %30 = arith.divf %28, %29 : vector<8x128xf32>
    %31 = vector.extract_strided_slice %13 {offsets = [0, 256], sizes = [8, 128], strides = [1, 1]} : vector<8x384xf32> to vector<8x128xf32>
    %32 = vector.extract_strided_slice %14 {offsets = [0, 256], sizes = [8, 128], strides = [1, 1]} : vector<8x384xf32> to vector<8x128xf32>
    %33 = arith.addf %32, %8 : vector<8x128xf32>
    %34 = arith.mulf %22, %33 : vector<8x128xf32>
    %35 = arith.addf %31, %34 : vector<8x128xf32>
    %36 = math.tanh %35 : vector<8x128xf32>
    %cst_14 = arith.constant 1.000000e+00 : f32
    %37 = vector.broadcast %cst_14 : f32 to vector<8x128xf32>
    %38 = arith.subf %37, %30 : vector<8x128xf32>
    %39 = arith.mulf %38, %36 : vector<8x128xf32>
    %40 = arith.mulf %30, %9 : vector<8x128xf32>
    %41 = arith.addf %39, %40 : vector<8x128xf32>
    %c0_15 = arith.constant 0 : index
    %42 = arith.index_cast %c0_i32_8 : i32 to index
    %c0_16 = arith.constant 0 : index
    %c0_17 = arith.constant 0 : index
    %43 = vector.load %arg3[%c0_15, %42, %c0_16, %c0_17] : memref<1x8x8x1xf32, #tpu.memory_space<vmem>>, vector<1x1x8x1xf32>
    %44 = vector.shape_cast %43 : vector<1x1x8x1xf32> to vector<1x8x1xf32>
    %45 = vector.shape_cast %44 : vector<1x8x1xf32> to vector<8x1xf32>
    %46 = vector.broadcast %45 : vector<8x1xf32> to vector<8x128xf32>
    %47 = arith.mulf %46, %41 : vector<8x128xf32>
    %48 = vector.shape_cast %47 : vector<8x128xf32> to vector<1x8x128xf32>
    %c0_18 = arith.constant 0 : index
    %49 = arith.index_cast %c0_i32_8 : i32 to index
    %c0_19 = arith.constant 0 : index
    %c0_20 = arith.constant 0 : index
    %50 = vector.load %arg7[%c0_18, %49, %c0_19, %c0_20] : memref<1x8x8x128xf32, #tpu.memory_space<vmem>>, vector<1x1x8x128xf32>
    %51 = vector.shape_cast %50 : vector<1x1x8x128xf32> to vector<1x8x128xf32>
    %52 = vector.shape_cast %48 : vector<1x8x128xf32> to vector<1x1x8x128xf32>
    tpu.vector_store %arg7[%c0_18, %49, %c0_19, %c0_20], %52 {strides = array<i32>} : memref<1x8x8x128xf32, #tpu.memory_space<vmem>>, vector<1x1x8x128xf32>,
    %53 = vector.broadcast %45 : vector<8x1xf32> to vector<8x128xf32>
    %54 = arith.mulf %53, %41 : vector<8x128xf32>
    %cst_21 = arith.constant 1.000000e+00 : f32
    %55 = vector.broadcast %cst_21 : f32 to vector<8x1xf32>
    %56 = arith.subf %55, %45 : vector<8x1xf32>
    %57 = vector.broadcast %56 : vector<8x1xf32> to vector<8x128xf32>
    %58 = arith.mulf %57, %9 : vector<8x128xf32>
    %59 = arith.addf %54, %58 : vector<8x128xf32>
    %c1_i32 = arith.constant 1 : i32
    %c0_22 = arith.constant 0 : index
    %60 = arith.index_cast %c1_i32 : i32 to index
    %c0_23 = arith.constant 0 : index
    %c0_24 = arith.constant 0 : index
    %61 = vector.load %arg2[%c0_22, %60, %c0_23, %c0_24] : memref<1x8x8x384xf32, #tpu.memory_space<vmem>>, vector<1x1x8x384xf32>
    %62 = vector.shape_cast %61 : vector<1x1x8x384xf32> to vector<1x8x384xf32>
    %63 = vector.shape_cast %62 : vector<1x8x384xf32> to vector<8x384xf32>
    %cst_25 = arith.constant dense<0.000000e+00> : vector<8x384xf32>
    %64 = tpu.matmul %59, %4, %cst_25 {dimension_numbers = #tpu.dot_dimension_numbers<[1], [0], [0], [1], [0, 0, 1, 1], [], []>} : vector<8x128xf32>, vector<128x384xf32>, vector<8x384xf32> -> vector<8x384xf32>
    %65 = vector.extract_strided_slice %63 {offsets = [0, 0], sizes = [8, 128], strides = [1, 1]} : vector<8x384xf32> to vector<8x128xf32>
    %66 = vector.extract_strided_slice %64 {offsets = [0, 0], sizes = [8, 128], strides = [1, 1]} : vector<8x384xf32> to vector<8x128xf32>
    %67 = arith.addf %65, %66 : vector<8x128xf32>
    %68 = arith.negf %67 : vector<8x128xf32>
    %69 = math.exp %68 : vector<8x128xf32>
    %cst_26 = arith.constant 1.000000e+00 : f32
    %70 = vector.broadcast %cst_26 : f32 to vector<8x128xf32>
    %71 = arith.addf %70, %69 : vector<8x128xf32>
    %72 = arith.divf %70, %71 : vector<8x128xf32>
    %73 = vector.extract_strided_slice %63 {offsets = [0, 128], sizes = [8, 128], strides = [1, 1]} : vector<8x384xf32> to vector<8x128xf32>
    %74 = vector.extract_strided_slice %64 {offsets = [0, 128], sizes = [8, 128], strides = [1, 1]} : vector<8x384xf32> to vector<8x128xf32>
    %75 = arith.addf %73, %74 : vector<8x128xf32>
    %76 = arith.negf %75 : vector<8x128xf32>
    %77 = math.exp %76 : vector<8x128xf32>
    %cst_27 = arith.constant 1.000000e+00 : f32
    %78 = vector.broadcast %cst_27 : f32 to vector<8x128xf32>
    %79 = arith.addf %78, %77 : vector<8x128xf32>
    %80 = arith.divf %78, %79 : vector<8x128xf32>
    %81 = vector.extract_strided_slice %63 {offsets = [0, 256], sizes = [8, 128], strides = [1, 1]} : vector<8x384xf32> to vector<8x128xf32>
    %82 = vector.extract_strided_slice %64 {offsets = [0, 256], sizes = [8, 128], strides = [1, 1]} : vector<8x384xf32> to vector<8x128xf32>
    %83 = arith.addf %82, %8 : vector<8x128xf32>
    %84 = arith.mulf %72, %83 : vector<8x128xf32>
    %85 = arith.addf %81, %84 : vector<8x128xf32>
    %86 = math.tanh %85 : vector<8x128xf32>
    %cst_28 = arith.constant 1.000000e+00 : f32
    %87 = vector.broadcast %cst_28 : f32 to vector<8x128xf32>
    %88 = arith.subf %87, %80 : vector<8x128xf32>
    %89 = arith.mulf %88, %86 : vector<8x128xf32>
    %90 = arith.mulf %80, %59 : vector<8x128xf32>
    %91 = arith.addf %89, %90 : vector<8x128xf32>
    %c0_29 = arith.constant 0 : index
    %92 = arith.index_cast %c1_i32 : i32 to index
    %c0_30 = arith.constant 0 : index
    %c0_31 = arith.constant 0 : index
    %93 = vector.load %arg3[%c0_29, %92, %c0_30, %c0_31] : memref<1x8x8x1xf32, #tpu.memory_space<vmem>>, vector<1x1x8x1xf32>
    %94 = vector.shape_cast %93 : vector<1x1x8x1xf32> to vector<1x8x1xf32>
    %95 = vector.shape_cast %94 : vector<1x8x1xf32> to vector<8x1xf32>
    %96 = vector.broadcast %95 : vector<8x1xf32> to vector<8x128xf32>
    %97 = arith.mulf %96, %91 : vector<8x128xf32>
    %98 = vector.shape_cast %97 : vector<8x128xf32> to vector<1x8x128xf32>
    %c0_32 = arith.constant 0 : index
    %99 = arith.index_cast %c1_i32 : i32 to index
    %c0_33 = arith.constant 0 : index
    %c0_34 = arith.constant 0 : index
    %100 = vector.load %arg7[%c0_32, %99, %c0_33, %c0_34] : memref<1x8x8x128xf32, #tpu.memory_space<vmem>>, vector<1x1x8x128xf32>
    %101 = vector.shape_cast %100 : vector<1x1x8x128xf32> to vector<1x8x128xf32>
    %102 = vector.shape_cast %98 : vector<1x8x128xf32> to vector<1x1x8x128xf32>
    tpu.vector_store %arg7[%c0_32, %99, %c0_33, %c0_34], %102 {strides = array<i32>} : memref<1x8x8x128xf32, #tpu.memory_space<vmem>>, vector<1x1x8x128xf32>,
    %103 = vector.broadcast %95 : vector<8x1xf32> to vector<8x128xf32>
    %104 = arith.mulf %103, %91 : vector<8x128xf32>
    %cst_35 = arith.constant 1.000000e+00 : f32
    %105 = vector.broadcast %cst_35 : f32 to vector<8x1xf32>
    %106 = arith.subf %105, %95 : vector<8x1xf32>
    %107 = vector.broadcast %106 : vector<8x1xf32> to vector<8x128xf32>
    %108 = arith.mulf %107, %59 : vector<8x128xf32>
    %109 = arith.addf %104, %108 : vector<8x128xf32>
    %c2_i32 = arith.constant 2 : i32
    %c0_36 = arith.constant 0 : index
    %110 = arith.index_cast %c2_i32 : i32 to index
    %c0_37 = arith.constant 0 : index
    %c0_38 = arith.constant 0 : index
    %111 = vector.load %arg2[%c0_36, %110, %c0_37, %c0_38] : memref<1x8x8x384xf32, #tpu.memory_space<vmem>>, vector<1x1x8x384xf32>
    %112 = vector.shape_cast %111 : vector<1x1x8x384xf32> to vector<1x8x384xf32>
    %113 = vector.shape_cast %112 : vector<1x8x384xf32> to vector<8x384xf32>
    %cst_39 = arith.constant dense<0.000000e+00> : vector<8x384xf32>
    %114 = tpu.matmul %109, %4, %cst_39 {dimension_numbers = #tpu.dot_dimension_numbers<[1], [0], [0], [1], [0, 0, 1, 1], [], []>} : vector<8x128xf32>, vector<128x384xf32>, vector<8x384xf32> -> vector<8x384xf32>
    %115 = vector.extract_strided_slice %113 {offsets = [0, 0], sizes = [8, 128], strides = [1, 1]} : vector<8x384xf32> to vector<8x128xf32>
    %116 = vector.extract_strided_slice %114 {offsets = [0, 0], sizes = [8, 128], strides = [1, 1]} : vector<8x384xf32> to vector<8x128xf32>
    %117 = arith.addf %115, %116 : vector<8x128xf32>
    %118 = arith.negf %117 : vector<8x128xf32>
    %119 = math.exp %118 : vector<8x128xf32>
    %cst_40 = arith.constant 1.000000e+00 : f32
    %120 = vector.broadcast %cst_40 : f32 to vector<8x128xf32>
    %121 = arith.addf %120, %119 : vector<8x128xf32>
    %122 = arith.divf %120, %121 : vector<8x128xf32>
    %123 = vector.extract_strided_slice %113 {offsets = [0, 128], sizes = [8, 128], strides = [1, 1]} : vector<8x384xf32> to vector<8x128xf32>
    %124 = vector.extract_strided_slice %114 {offsets = [0, 128], sizes = [8, 128], strides = [1, 1]} : vector<8x384xf32> to vector<8x128xf32>
    %125 = arith.addf %123, %124 : vector<8x128xf32>
    %126 = arith.negf %125 : vector<8x128xf32>
    %127 = math.exp %126 : vector<8x128xf32>
    %cst_41 = arith.constant 1.000000e+00 : f32
    %128 = vector.broadcast %cst_41 : f32 to vector<8x128xf32>
    %129 = arith.addf %128, %127 : vector<8x128xf32>
    %130 = arith.divf %128, %129 : vector<8x128xf32>
    %131 = vector.extract_strided_slice %113 {offsets = [0, 256], sizes = [8, 128], strides = [1, 1]} : vector<8x384xf32> to vector<8x128xf32>
    %132 = vector.extract_strided_slice %114 {offsets = [0, 256], sizes = [8, 128], strides = [1, 1]} : vector<8x384xf32> to vector<8x128xf32>
    %133 = arith.addf %132, %8 : vector<8x128xf32>
    %134 = arith.mulf %122, %133 : vector<8x128xf32>
    %135 = arith.addf %131, %134 : vector<8x128xf32>
    %136 = math.tanh %135 : vector<8x128xf32>
    %cst_42 = arith.constant 1.000000e+00 : f32
    %137 = vector.broadcast %cst_42 : f32 to vector<8x128xf32>
    %138 = arith.subf %137, %130 : vector<8x128xf32>
    %139 = arith.mulf %138, %136 : vector<8x128xf32>
    %140 = arith.mulf %130, %109 : vector<8x128xf32>
    %141 = arith.addf %139, %140 : vector<8x128xf32>
    %c0_43 = arith.constant 0 : index
    %142 = arith.index_cast %c2_i32 : i32 to index
    %c0_44 = arith.constant 0 : index
    %c0_45 = arith.constant 0 : index
    %143 = vector.load %arg3[%c0_43, %142, %c0_44, %c0_45] : memref<1x8x8x1xf32, #tpu.memory_space<vmem>>, vector<1x1x8x1xf32>
    %144 = vector.shape_cast %143 : vector<1x1x8x1xf32> to vector<1x8x1xf32>
    %145 = vector.shape_cast %144 : vector<1x8x1xf32> to vector<8x1xf32>
    %146 = vector.broadcast %145 : vector<8x1xf32> to vector<8x128xf32>
    %147 = arith.mulf %146, %141 : vector<8x128xf32>
    %148 = vector.shape_cast %147 : vector<8x128xf32> to vector<1x8x128xf32>
    %c0_46 = arith.constant 0 : index
    %149 = arith.index_cast %c2_i32 : i32 to index
    %c0_47 = arith.constant 0 : index
    %c0_48 = arith.constant 0 : index
    %150 = vector.load %arg7[%c0_46, %149, %c0_47, %c0_48] : memref<1x8x8x128xf32, #tpu.memory_space<vmem>>, vector<1x1x8x128xf32>
    %151 = vector.shape_cast %150 : vector<1x1x8x128xf32> to vector<1x8x128xf32>
    %152 = vector.shape_cast %148 : vector<1x8x128xf32> to vector<1x1x8x128xf32>
    tpu.vector_store %arg7[%c0_46, %149, %c0_47, %c0_48], %152 {strides = array<i32>} : memref<1x8x8x128xf32, #tpu.memory_space<vmem>>, vector<1x1x8x128xf32>,
    %153 = vector.broadcast %145 : vector<8x1xf32> to vector<8x128xf32>
    %154 = arith.mulf %153, %141 : vector<8x128xf32>
    %cst_49 = arith.constant 1.000000e+00 : f32
    %155 = vector.broadcast %cst_49 : f32 to vector<8x1xf32>
    %156 = arith.subf %155, %145 : vector<8x1xf32>
    %157 = vector.broadcast %156 : vector<8x1xf32> to vector<8x128xf32>
    %158 = arith.mulf %157, %109 : vector<8x128xf32>
    %159 = arith.addf %154, %158 : vector<8x128xf32>
    %c3_i32 = arith.constant 3 : i32
    %c0_50 = arith.constant 0 : index
    %160 = arith.index_cast %c3_i32 : i32 to index
    %c0_51 = arith.constant 0 : index
    %c0_52 = arith.constant 0 : index
    %161 = vector.load %arg2[%c0_50, %160, %c0_51, %c0_52] : memref<1x8x8x384xf32, #tpu.memory_space<vmem>>, vector<1x1x8x384xf32>
    %162 = vector.shape_cast %161 : vector<1x1x8x384xf32> to vector<1x8x384xf32>
    %163 = vector.shape_cast %162 : vector<1x8x384xf32> to vector<8x384xf32>
    %cst_53 = arith.constant dense<0.000000e+00> : vector<8x384xf32>
    %164 = tpu.matmul %159, %4, %cst_53 {dimension_numbers = #tpu.dot_dimension_numbers<[1], [0], [0], [1], [0, 0, 1, 1], [], []>} : vector<8x128xf32>, vector<128x384xf32>, vector<8x384xf32> -> vector<8x384xf32>
    %165 = vector.extract_strided_slice %163 {offsets = [0, 0], sizes = [8, 128], strides = [1, 1]} : vector<8x384xf32> to vector<8x128xf32>
    %166 = vector.extract_strided_slice %164 {offsets = [0, 0], sizes = [8, 128], strides = [1, 1]} : vector<8x384xf32> to vector<8x128xf32>
    %167 = arith.addf %165, %166 : vector<8x128xf32>
    %168 = arith.negf %167 : vector<8x128xf32>
    %169 = math.exp %168 : vector<8x128xf32>
    %cst_54 = arith.constant 1.000000e+00 : f32
    %170 = vector.broadcast %cst_54 : f32 to vector<8x128xf32>
    %171 = arith.addf %170, %169 : vector<8x128xf32>
    %172 = arith.divf %170, %171 : vector<8x128xf32>
    %173 = vector.extract_strided_slice %163 {offsets = [0, 128], sizes = [8, 128], strides = [1, 1]} : vector<8x384xf32> to vector<8x128xf32>
    %174 = vector.extract_strided_slice %164 {offsets = [0, 128], sizes = [8, 128], strides = [1, 1]} : vector<8x384xf32> to vector<8x128xf32>
    %175 = arith.addf %173, %174 : vector<8x128xf32>
    %176 = arith.negf %175 : vector<8x128xf32>
    %177 = math.exp %176 : vector<8x128xf32>
    %cst_55 = arith.constant 1.000000e+00 : f32
    %178 = vector.broadcast %cst_55 : f32 to vector<8x128xf32>
    %179 = arith.addf %178, %177 : vector<8x128xf32>
    %180 = arith.divf %178, %179 : vector<8x128xf32>
    %181 = vector.extract_strided_slice %163 {offsets = [0, 256], sizes = [8, 128], strides = [1, 1]} : vector<8x384xf32> to vector<8x128xf32>
    %182 = vector.extract_strided_slice %164 {offsets = [0, 256], sizes = [8, 128], strides = [1, 1]} : vector<8x384xf32> to vector<8x128xf32>
    %183 = arith.addf %182, %8 : vector<8x128xf32>
    %184 = arith.mulf %172, %183 : vector<8x128xf32>
    %185 = arith.addf %181, %184 : vector<8x128xf32>
    %186 = math.tanh %185 : vector<8x128xf32>
    %cst_56 = arith.constant 1.000000e+00 : f32
    %187 = vector.broadcast %cst_56 : f32 to vector<8x128xf32>
    %188 = arith.subf %187, %180 : vector<8x128xf32>
    %189 = arith.mulf %188, %186 : vector<8x128xf32>
    %190 = arith.mulf %180, %159 : vector<8x128xf32>
    %191 = arith.addf %189, %190 : vector<8x128xf32>
    %c0_57 = arith.constant 0 : index
    %192 = arith.index_cast %c3_i32 : i32 to index
    %c0_58 = arith.constant 0 : index
    %c0_59 = arith.constant 0 : index
    %193 = vector.load %arg3[%c0_57, %192, %c0_58, %c0_59] : memref<1x8x8x1xf32, #tpu.memory_space<vmem>>, vector<1x1x8x1xf32>
    %194 = vector.shape_cast %193 : vector<1x1x8x1xf32> to vector<1x8x1xf32>
    %195 = vector.shape_cast %194 : vector<1x8x1xf32> to vector<8x1xf32>
    %196 = vector.broadcast %195 : vector<8x1xf32> to vector<8x128xf32>
    %197 = arith.mulf %196, %191 : vector<8x128xf32>
    %198 = vector.shape_cast %197 : vector<8x128xf32> to vector<1x8x128xf32>
    %c0_60 = arith.constant 0 : index
    %199 = arith.index_cast %c3_i32 : i32 to index
    %c0_61 = arith.constant 0 : index
    %c0_62 = arith.constant 0 : index
    %200 = vector.load %arg7[%c0_60, %199, %c0_61, %c0_62] : memref<1x8x8x128xf32, #tpu.memory_space<vmem>>, vector<1x1x8x128xf32>
    %201 = vector.shape_cast %200 : vector<1x1x8x128xf32> to vector<1x8x128xf32>
    %202 = vector.shape_cast %198 : vector<1x8x128xf32> to vector<1x1x8x128xf32>
    tpu.vector_store %arg7[%c0_60, %199, %c0_61, %c0_62], %202 {strides = array<i32>} : memref<1x8x8x128xf32, #tpu.memory_space<vmem>>, vector<1x1x8x128xf32>,
    %203 = vector.broadcast %195 : vector<8x1xf32> to vector<8x128xf32>
    %204 = arith.mulf %203, %191 : vector<8x128xf32>
    %cst_63 = arith.constant 1.000000e+00 : f32
    %205 = vector.broadcast %cst_63 : f32 to vector<8x1xf32>
    %206 = arith.subf %205, %195 : vector<8x1xf32>
    %207 = vector.broadcast %206 : vector<8x1xf32> to vector<8x128xf32>
    %208 = arith.mulf %207, %159 : vector<8x128xf32>
    %209 = arith.addf %204, %208 : vector<8x128xf32>
    %c4_i32 = arith.constant 4 : i32
    %c0_64 = arith.constant 0 : index
    %210 = arith.index_cast %c4_i32 : i32 to index
    %c0_65 = arith.constant 0 : index
    %c0_66 = arith.constant 0 : index
    %211 = vector.load %arg2[%c0_64, %210, %c0_65, %c0_66] : memref<1x8x8x384xf32, #tpu.memory_space<vmem>>, vector<1x1x8x384xf32>
    %212 = vector.shape_cast %211 : vector<1x1x8x384xf32> to vector<1x8x384xf32>
    %213 = vector.shape_cast %212 : vector<1x8x384xf32> to vector<8x384xf32>
    %cst_67 = arith.constant dense<0.000000e+00> : vector<8x384xf32>
    %214 = tpu.matmul %209, %4, %cst_67 {dimension_numbers = #tpu.dot_dimension_numbers<[1], [0], [0], [1], [0, 0, 1, 1], [], []>} : vector<8x128xf32>, vector<128x384xf32>, vector<8x384xf32> -> vector<8x384xf32>
    %215 = vector.extract_strided_slice %213 {offsets = [0, 0], sizes = [8, 128], strides = [1, 1]} : vector<8x384xf32> to vector<8x128xf32>
    %216 = vector.extract_strided_slice %214 {offsets = [0, 0], sizes = [8, 128], strides = [1, 1]} : vector<8x384xf32> to vector<8x128xf32>
    %217 = arith.addf %215, %216 : vector<8x128xf32>
    %218 = arith.negf %217 : vector<8x128xf32>
    %219 = math.exp %218 : vector<8x128xf32>
    %cst_68 = arith.constant 1.000000e+00 : f32
    %220 = vector.broadcast %cst_68 : f32 to vector<8x128xf32>
    %221 = arith.addf %220, %219 : vector<8x128xf32>
    %222 = arith.divf %220, %221 : vector<8x128xf32>
    %223 = vector.extract_strided_slice %213 {offsets = [0, 128], sizes = [8, 128], strides = [1, 1]} : vector<8x384xf32> to vector<8x128xf32>
    %224 = vector.extract_strided_slice %214 {offsets = [0, 128], sizes = [8, 128], strides = [1, 1]} : vector<8x384xf32> to vector<8x128xf32>
    %225 = arith.addf %223, %224 : vector<8x128xf32>
    %226 = arith.negf %225 : vector<8x128xf32>
    %227 = math.exp %226 : vector<8x128xf32>
    %cst_69 = arith.constant 1.000000e+00 : f32
    %228 = vector.broadcast %cst_69 : f32 to vector<8x128xf32>
    %229 = arith.addf %228, %227 : vector<8x128xf32>
    %230 = arith.divf %228, %229 : vector<8x128xf32>
    %231 = vector.extract_strided_slice %213 {offsets = [0, 256], sizes = [8, 128], strides = [1, 1]} : vector<8x384xf32> to vector<8x128xf32>
    %232 = vector.extract_strided_slice %214 {offsets = [0, 256], sizes = [8, 128], strides = [1, 1]} : vector<8x384xf32> to vector<8x128xf32>
    %233 = arith.addf %232, %8 : vector<8x128xf32>
    %234 = arith.mulf %222, %233 : vector<8x128xf32>
    %235 = arith.addf %231, %234 : vector<8x128xf32>
    %236 = math.tanh %235 : vector<8x128xf32>
    %cst_70 = arith.constant 1.000000e+00 : f32
    %237 = vector.broadcast %cst_70 : f32 to vector<8x128xf32>
    %238 = arith.subf %237, %230 : vector<8x128xf32>
    %239 = arith.mulf %238, %236 : vector<8x128xf32>
    %240 = arith.mulf %230, %209 : vector<8x128xf32>
    %241 = arith.addf %239, %240 : vector<8x128xf32>
    %c0_71 = arith.constant 0 : index
    %242 = arith.index_cast %c4_i32 : i32 to index
    %c0_72 = arith.constant 0 : index
    %c0_73 = arith.constant 0 : index
    %243 = vector.load %arg3[%c0_71, %242, %c0_72, %c0_73] : memref<1x8x8x1xf32, #tpu.memory_space<vmem>>, vector<1x1x8x1xf32>
    %244 = vector.shape_cast %243 : vector<1x1x8x1xf32> to vector<1x8x1xf32>
    %245 = vector.shape_cast %244 : vector<1x8x1xf32> to vector<8x1xf32>
    %246 = vector.broadcast %245 : vector<8x1xf32> to vector<8x128xf32>
    %247 = arith.mulf %246, %241 : vector<8x128xf32>
    %248 = vector.shape_cast %247 : vector<8x128xf32> to vector<1x8x128xf32>
    %c0_74 = arith.constant 0 : index
    %249 = arith.index_cast %c4_i32 : i32 to index
    %c0_75 = arith.constant 0 : index
    %c0_76 = arith.constant 0 : index
    %250 = vector.load %arg7[%c0_74, %249, %c0_75, %c0_76] : memref<1x8x8x128xf32, #tpu.memory_space<vmem>>, vector<1x1x8x128xf32>
    %251 = vector.shape_cast %250 : vector<1x1x8x128xf32> to vector<1x8x128xf32>
    %252 = vector.shape_cast %248 : vector<1x8x128xf32> to vector<1x1x8x128xf32>
    tpu.vector_store %arg7[%c0_74, %249, %c0_75, %c0_76], %252 {strides = array<i32>} : memref<1x8x8x128xf32, #tpu.memory_space<vmem>>, vector<1x1x8x128xf32>,
    %253 = vector.broadcast %245 : vector<8x1xf32> to vector<8x128xf32>
    %254 = arith.mulf %253, %241 : vector<8x128xf32>
    %cst_77 = arith.constant 1.000000e+00 : f32
    %255 = vector.broadcast %cst_77 : f32 to vector<8x1xf32>
    %256 = arith.subf %255, %245 : vector<8x1xf32>
    %257 = vector.broadcast %256 : vector<8x1xf32> to vector<8x128xf32>
    %258 = arith.mulf %257, %209 : vector<8x128xf32>
    %259 = arith.addf %254, %258 : vector<8x128xf32>
    %c5_i32 = arith.constant 5 : i32
    %c0_78 = arith.constant 0 : index
    %260 = arith.index_cast %c5_i32 : i32 to index
    %c0_79 = arith.constant 0 : index
    %c0_80 = arith.constant 0 : index
    %261 = vector.load %arg2[%c0_78, %260, %c0_79, %c0_80] : memref<1x8x8x384xf32, #tpu.memory_space<vmem>>, vector<1x1x8x384xf32>
    %262 = vector.shape_cast %261 : vector<1x1x8x384xf32> to vector<1x8x384xf32>
    %263 = vector.shape_cast %262 : vector<1x8x384xf32> to vector<8x384xf32>
    %cst_81 = arith.constant dense<0.000000e+00> : vector<8x384xf32>
    %264 = tpu.matmul %259, %4, %cst_81 {dimension_numbers = #tpu.dot_dimension_numbers<[1], [0], [0], [1], [0, 0, 1, 1], [], []>} : vector<8x128xf32>, vector<128x384xf32>, vector<8x384xf32> -> vector<8x384xf32>
    %265 = vector.extract_strided_slice %263 {offsets = [0, 0], sizes = [8, 128], strides = [1, 1]} : vector<8x384xf32> to vector<8x128xf32>
    %266 = vector.extract_strided_slice %264 {offsets = [0, 0], sizes = [8, 128], strides = [1, 1]} : vector<8x384xf32> to vector<8x128xf32>
    %267 = arith.addf %265, %266 : vector<8x128xf32>
    %268 = arith.negf %267 : vector<8x128xf32>
    %269 = math.exp %268 : vector<8x128xf32>
    %cst_82 = arith.constant 1.000000e+00 : f32
    %270 = vector.broadcast %cst_82 : f32 to vector<8x128xf32>
    %271 = arith.addf %270, %269 : vector<8x128xf32>
    %272 = arith.divf %270, %271 : vector<8x128xf32>
    %273 = vector.extract_strided_slice %263 {offsets = [0, 128], sizes = [8, 128], strides = [1, 1]} : vector<8x384xf32> to vector<8x128xf32>
    %274 = vector.extract_strided_slice %264 {offsets = [0, 128], sizes = [8, 128], strides = [1, 1]} : vector<8x384xf32> to vector<8x128xf32>
    %275 = arith.addf %273, %274 : vector<8x128xf32>
    %276 = arith.negf %275 : vector<8x128xf32>
    %277 = math.exp %276 : vector<8x128xf32>
    %cst_83 = arith.constant 1.000000e+00 : f32
    %278 = vector.broadcast %cst_83 : f32 to vector<8x128xf32>
    %279 = arith.addf %278, %277 : vector<8x128xf32>
    %280 = arith.divf %278, %279 : vector<8x128xf32>
    %281 = vector.extract_strided_slice %263 {offsets = [0, 256], sizes = [8, 128], strides = [1, 1]} : vector<8x384xf32> to vector<8x128xf32>
    %282 = vector.extract_strided_slice %264 {offsets = [0, 256], sizes = [8, 128], strides = [1, 1]} : vector<8x384xf32> to vector<8x128xf32>
    %283 = arith.addf %282, %8 : vector<8x128xf32>
    %284 = arith.mulf %272, %283 : vector<8x128xf32>
    %285 = arith.addf %281, %284 : vector<8x128xf32>
    %286 = math.tanh %285 : vector<8x128xf32>
    %cst_84 = arith.constant 1.000000e+00 : f32
    %287 = vector.broadcast %cst_84 : f32 to vector<8x128xf32>
    %288 = arith.subf %287, %280 : vector<8x128xf32>
    %289 = arith.mulf %288, %286 : vector<8x128xf32>
    %290 = arith.mulf %280, %259 : vector<8x128xf32>
    %291 = arith.addf %289, %290 : vector<8x128xf32>
    %c0_85 = arith.constant 0 : index
    %292 = arith.index_cast %c5_i32 : i32 to index
    %c0_86 = arith.constant 0 : index
    %c0_87 = arith.constant 0 : index
    %293 = vector.load %arg3[%c0_85, %292, %c0_86, %c0_87] : memref<1x8x8x1xf32, #tpu.memory_space<vmem>>, vector<1x1x8x1xf32>
    %294 = vector.shape_cast %293 : vector<1x1x8x1xf32> to vector<1x8x1xf32>
    %295 = vector.shape_cast %294 : vector<1x8x1xf32> to vector<8x1xf32>
    %296 = vector.broadcast %295 : vector<8x1xf32> to vector<8x128xf32>
    %297 = arith.mulf %296, %291 : vector<8x128xf32>
    %298 = vector.shape_cast %297 : vector<8x128xf32> to vector<1x8x128xf32>
    %c0_88 = arith.constant 0 : index
    %299 = arith.index_cast %c5_i32 : i32 to index
    %c0_89 = arith.constant 0 : index
    %c0_90 = arith.constant 0 : index
    %300 = vector.load %arg7[%c0_88, %299, %c0_89, %c0_90] : memref<1x8x8x128xf32, #tpu.memory_space<vmem>>, vector<1x1x8x128xf32>
    %301 = vector.shape_cast %300 : vector<1x1x8x128xf32> to vector<1x8x128xf32>
    %302 = vector.shape_cast %298 : vector<1x8x128xf32> to vector<1x1x8x128xf32>
    tpu.vector_store %arg7[%c0_88, %299, %c0_89, %c0_90], %302 {strides = array<i32>} : memref<1x8x8x128xf32, #tpu.memory_space<vmem>>, vector<1x1x8x128xf32>,
    %303 = vector.broadcast %295 : vector<8x1xf32> to vector<8x128xf32>
    %304 = arith.mulf %303, %291 : vector<8x128xf32>
    %cst_91 = arith.constant 1.000000e+00 : f32
    %305 = vector.broadcast %cst_91 : f32 to vector<8x1xf32>
    %306 = arith.subf %305, %295 : vector<8x1xf32>
    %307 = vector.broadcast %306 : vector<8x1xf32> to vector<8x128xf32>
    %308 = arith.mulf %307, %259 : vector<8x128xf32>
    %309 = arith.addf %304, %308 : vector<8x128xf32>
    %c6_i32 = arith.constant 6 : i32
    %c0_92 = arith.constant 0 : index
    %310 = arith.index_cast %c6_i32 : i32 to index
    %c0_93 = arith.constant 0 : index
    %c0_94 = arith.constant 0 : index
    %311 = vector.load %arg2[%c0_92, %310, %c0_93, %c0_94] : memref<1x8x8x384xf32, #tpu.memory_space<vmem>>, vector<1x1x8x384xf32>
    %312 = vector.shape_cast %311 : vector<1x1x8x384xf32> to vector<1x8x384xf32>
    %313 = vector.shape_cast %312 : vector<1x8x384xf32> to vector<8x384xf32>
    %cst_95 = arith.constant dense<0.000000e+00> : vector<8x384xf32>
    %314 = tpu.matmul %309, %4, %cst_95 {dimension_numbers = #tpu.dot_dimension_numbers<[1], [0], [0], [1], [0, 0, 1, 1], [], []>} : vector<8x128xf32>, vector<128x384xf32>, vector<8x384xf32> -> vector<8x384xf32>
    %315 = vector.extract_strided_slice %313 {offsets = [0, 0], sizes = [8, 128], strides = [1, 1]} : vector<8x384xf32> to vector<8x128xf32>
    %316 = vector.extract_strided_slice %314 {offsets = [0, 0], sizes = [8, 128], strides = [1, 1]} : vector<8x384xf32> to vector<8x128xf32>
    %317 = arith.addf %315, %316 : vector<8x128xf32>
    %318 = arith.negf %317 : vector<8x128xf32>
    %319 = math.exp %318 : vector<8x128xf32>
    %cst_96 = arith.constant 1.000000e+00 : f32
    %320 = vector.broadcast %cst_96 : f32 to vector<8x128xf32>
    %321 = arith.addf %320, %319 : vector<8x128xf32>
    %322 = arith.divf %320, %321 : vector<8x128xf32>
    %323 = vector.extract_strided_slice %313 {offsets = [0, 128], sizes = [8, 128], strides = [1, 1]} : vector<8x384xf32> to vector<8x128xf32>
    %324 = vector.extract_strided_slice %314 {offsets = [0, 128], sizes = [8, 128], strides = [1, 1]} : vector<8x384xf32> to vector<8x128xf32>
    %325 = arith.addf %323, %324 : vector<8x128xf32>
    %326 = arith.negf %325 : vector<8x128xf32>
    %327 = math.exp %326 : vector<8x128xf32>
    %cst_97 = arith.constant 1.000000e+00 : f32
    %328 = vector.broadcast %cst_97 : f32 to vector<8x128xf32>
    %329 = arith.addf %328, %327 : vector<8x128xf32>
    %330 = arith.divf %328, %329 : vector<8x128xf32>
    %331 = vector.extract_strided_slice %313 {offsets = [0, 256], sizes = [8, 128], strides = [1, 1]} : vector<8x384xf32> to vector<8x128xf32>
    %332 = vector.extract_strided_slice %314 {offsets = [0, 256], sizes = [8, 128], strides = [1, 1]} : vector<8x384xf32> to vector<8x128xf32>
    %333 = arith.addf %332, %8 : vector<8x128xf32>
    %334 = arith.mulf %322, %333 : vector<8x128xf32>
    %335 = arith.addf %331, %334 : vector<8x128xf32>
    %336 = math.tanh %335 : vector<8x128xf32>
    %cst_98 = arith.constant 1.000000e+00 : f32
    %337 = vector.broadcast %cst_98 : f32 to vector<8x128xf32>
    %338 = arith.subf %337, %330 : vector<8x128xf32>
    %339 = arith.mulf %338, %336 : vector<8x128xf32>
    %340 = arith.mulf %330, %309 : vector<8x128xf32>
    %341 = arith.addf %339, %340 : vector<8x128xf32>
    %c0_99 = arith.constant 0 : index
    %342 = arith.index_cast %c6_i32 : i32 to index
    %c0_100 = arith.constant 0 : index
    %c0_101 = arith.constant 0 : index
    %343 = vector.load %arg3[%c0_99, %342, %c0_100, %c0_101] : memref<1x8x8x1xf32, #tpu.memory_space<vmem>>, vector<1x1x8x1xf32>
    %344 = vector.shape_cast %343 : vector<1x1x8x1xf32> to vector<1x8x1xf32>
    %345 = vector.shape_cast %344 : vector<1x8x1xf32> to vector<8x1xf32>
    %346 = vector.broadcast %345 : vector<8x1xf32> to vector<8x128xf32>
    %347 = arith.mulf %346, %341 : vector<8x128xf32>
    %348 = vector.shape_cast %347 : vector<8x128xf32> to vector<1x8x128xf32>
    %c0_102 = arith.constant 0 : index
    %349 = arith.index_cast %c6_i32 : i32 to index
    %c0_103 = arith.constant 0 : index
    %c0_104 = arith.constant 0 : index
    %350 = vector.load %arg7[%c0_102, %349, %c0_103, %c0_104] : memref<1x8x8x128xf32, #tpu.memory_space<vmem>>, vector<1x1x8x128xf32>
    %351 = vector.shape_cast %350 : vector<1x1x8x128xf32> to vector<1x8x128xf32>
    %352 = vector.shape_cast %348 : vector<1x8x128xf32> to vector<1x1x8x128xf32>
    tpu.vector_store %arg7[%c0_102, %349, %c0_103, %c0_104], %352 {strides = array<i32>} : memref<1x8x8x128xf32, #tpu.memory_space<vmem>>, vector<1x1x8x128xf32>,
    %353 = vector.broadcast %345 : vector<8x1xf32> to vector<8x128xf32>
    %354 = arith.mulf %353, %341 : vector<8x128xf32>
    %cst_105 = arith.constant 1.000000e+00 : f32
    %355 = vector.broadcast %cst_105 : f32 to vector<8x1xf32>
    %356 = arith.subf %355, %345 : vector<8x1xf32>
    %357 = vector.broadcast %356 : vector<8x1xf32> to vector<8x128xf32>
    %358 = arith.mulf %357, %309 : vector<8x128xf32>
    %359 = arith.addf %354, %358 : vector<8x128xf32>
    %c7_i32 = arith.constant 7 : i32
    %c0_106 = arith.constant 0 : index
    %360 = arith.index_cast %c7_i32 : i32 to index
    %c0_107 = arith.constant 0 : index
    %c0_108 = arith.constant 0 : index
    %361 = vector.load %arg2[%c0_106, %360, %c0_107, %c0_108] : memref<1x8x8x384xf32, #tpu.memory_space<vmem>>, vector<1x1x8x384xf32>
    %362 = vector.shape_cast %361 : vector<1x1x8x384xf32> to vector<1x8x384xf32>
    %363 = vector.shape_cast %362 : vector<1x8x384xf32> to vector<8x384xf32>
    %cst_109 = arith.constant dense<0.000000e+00> : vector<8x384xf32>
    %364 = tpu.matmul %359, %4, %cst_109 {dimension_numbers = #tpu.dot_dimension_numbers<[1], [0], [0], [1], [0, 0, 1, 1], [], []>} : vector<8x128xf32>, vector<128x384xf32>, vector<8x384xf32> -> vector<8x384xf32>
    %365 = vector.extract_strided_slice %363 {offsets = [0, 0], sizes = [8, 128], strides = [1, 1]} : vector<8x384xf32> to vector<8x128xf32>
    %366 = vector.extract_strided_slice %364 {offsets = [0, 0], sizes = [8, 128], strides = [1, 1]} : vector<8x384xf32> to vector<8x128xf32>
    %367 = arith.addf %365, %366 : vector<8x128xf32>
    %368 = arith.negf %367 : vector<8x128xf32>
    %369 = math.exp %368 : vector<8x128xf32>
    %cst_110 = arith.constant 1.000000e+00 : f32
    %370 = vector.broadcast %cst_110 : f32 to vector<8x128xf32>
    %371 = arith.addf %370, %369 : vector<8x128xf32>
    %372 = arith.divf %370, %371 : vector<8x128xf32>
    %373 = vector.extract_strided_slice %363 {offsets = [0, 128], sizes = [8, 128], strides = [1, 1]} : vector<8x384xf32> to vector<8x128xf32>
    %374 = vector.extract_strided_slice %364 {offsets = [0, 128], sizes = [8, 128], strides = [1, 1]} : vector<8x384xf32> to vector<8x128xf32>
    %375 = arith.addf %373, %374 : vector<8x128xf32>
    %376 = arith.negf %375 : vector<8x128xf32>
    %377 = math.exp %376 : vector<8x128xf32>
    %cst_111 = arith.constant 1.000000e+00 : f32
    %378 = vector.broadcast %cst_111 : f32 to vector<8x128xf32>
    %379 = arith.addf %378, %377 : vector<8x128xf32>
    %380 = arith.divf %378, %379 : vector<8x128xf32>
    %381 = vector.extract_strided_slice %363 {offsets = [0, 256], sizes = [8, 128], strides = [1, 1]} : vector<8x384xf32> to vector<8x128xf32>
    %382 = vector.extract_strided_slice %364 {offsets = [0, 256], sizes = [8, 128], strides = [1, 1]} : vector<8x384xf32> to vector<8x128xf32>
    %383 = arith.addf %382, %8 : vector<8x128xf32>
    %384 = arith.mulf %372, %383 : vector<8x128xf32>
    %385 = arith.addf %381, %384 : vector<8x128xf32>
    %386 = math.tanh %385 : vector<8x128xf32>
    %cst_112 = arith.constant 1.000000e+00 : f32
    %387 = vector.broadcast %cst_112 : f32 to vector<8x128xf32>
    %388 = arith.subf %387, %380 : vector<8x128xf32>
    %389 = arith.mulf %388, %386 : vector<8x128xf32>
    %390 = arith.mulf %380, %359 : vector<8x128xf32>
    %391 = arith.addf %389, %390 : vector<8x128xf32>
    %c0_113 = arith.constant 0 : index
    %392 = arith.index_cast %c7_i32 : i32 to index
    %c0_114 = arith.constant 0 : index
    %c0_115 = arith.constant 0 : index
    %393 = vector.load %arg3[%c0_113, %392, %c0_114, %c0_115] : memref<1x8x8x1xf32, #tpu.memory_space<vmem>>, vector<1x1x8x1xf32>
    %394 = vector.shape_cast %393 : vector<1x1x8x1xf32> to vector<1x8x1xf32>
    %395 = vector.shape_cast %394 : vector<1x8x1xf32> to vector<8x1xf32>
    %396 = vector.broadcast %395 : vector<8x1xf32> to vector<8x128xf32>
    %397 = arith.mulf %396, %391 : vector<8x128xf32>
    %398 = vector.shape_cast %397 : vector<8x128xf32> to vector<1x8x128xf32>
    %c0_116 = arith.constant 0 : index
    %399 = arith.index_cast %c7_i32 : i32 to index
    %c0_117 = arith.constant 0 : index
    %c0_118 = arith.constant 0 : index
    %400 = vector.load %arg7[%c0_116, %399, %c0_117, %c0_118] : memref<1x8x8x128xf32, #tpu.memory_space<vmem>>, vector<1x1x8x128xf32>
    %401 = vector.shape_cast %400 : vector<1x1x8x128xf32> to vector<1x8x128xf32>
    %402 = vector.shape_cast %398 : vector<1x8x128xf32> to vector<1x1x8x128xf32>
    tpu.vector_store %arg7[%c0_116, %399, %c0_117, %c0_118], %402 {strides = array<i32>} : memref<1x8x8x128xf32, #tpu.memory_space<vmem>>, vector<1x1x8x128xf32>,
    %403 = vector.broadcast %395 : vector<8x1xf32> to vector<8x128xf32>
    %404 = arith.mulf %403, %391 : vector<8x128xf32>
    %cst_119 = arith.constant 1.000000e+00 : f32
    %405 = vector.broadcast %cst_119 : f32 to vector<8x1xf32>
    %406 = arith.subf %405, %395 : vector<8x1xf32>
    %407 = vector.broadcast %406 : vector<8x1xf32> to vector<8x128xf32>
    %408 = arith.mulf %407, %359 : vector<8x128xf32>
    %409 = arith.addf %404, %408 : vector<8x128xf32>
    %c8_i32 = arith.constant 8 : i32
    %c0_120 = arith.constant 0 : index
    %c0_121 = arith.constant 0 : index
    %410 = vector.load %arg9[%c0_120, %c0_121] : memref<8x128xf32, #tpu.memory_space<vmem>>, vector<8x128xf32>
    tpu.vector_store %arg9[%c0_120, %c0_121], %409 {strides = array<i32>} : memref<8x128xf32, #tpu.memory_space<vmem>>, vector<8x128xf32>,
    %c0_i32_122 = arith.constant 0 : i32
    %411 = arith.cmpi eq, %arg1, %c0_i32_122 : i32
    %412 = arith.extui %411 : i1 to i32
    %c0_i32_123 = arith.constant 0 : i32
    %413 = arith.cmpi ne, %412, %c0_i32_123 : i32
    scf.if %413 {
      %c0_124 = arith.constant 0 : index
      %c0_125 = arith.constant 0 : index
      %c0_126 = arith.constant 0 : index
      %414 = vector.load %arg8[%c0_124, %c0_125, %c0_126] : memref<1x8x128xf32, #tpu.memory_space<vmem>>, vector<1x8x128xf32>
      %415 = vector.shape_cast %414 : vector<1x8x128xf32> to vector<8x128xf32>
      %416 = vector.shape_cast %409 : vector<8x128xf32> to vector<1x8x128xf32>
      tpu.vector_store %arg8[%c0_124, %c0_125, %c0_126], %416 {strides = array<i32>} : memref<1x8x128xf32, #tpu.memory_space<vmem>>, vector<1x8x128xf32>,
    } else {
    }
    return
  }
  func.func @transform_0(%arg0: i32, %arg1: i32) -> (i32, i32, i32, i32) {
    %c0_i32 = arith.constant 0 : i32
    %c0_i32_0 = arith.constant 0 : i32
    %c0_i32_1 = arith.constant 0 : i32
    return %arg0, %arg1, %c0_i32, %c0_i32_0 : i32, i32, i32, i32
  }
  func.func @transform_1(%arg0: i32, %arg1: i32) -> (i32, i32, i32, i32) {
    %c0_i32 = arith.constant 0 : i32
    %c0_i32_0 = arith.constant 0 : i32
    %c0_i32_1 = arith.constant 0 : i32
    return %arg0, %arg1, %c0_i32, %c0_i32_0 : i32, i32, i32, i32
  }
  func.func @transform_2(%arg0: i32, %arg1: i32) -> (i32, i32, i32) {
    %c0_i32 = arith.constant 0 : i32
    %c0_i32_0 = arith.constant 0 : i32
    %c0_i32_1 = arith.constant 0 : i32
    return %arg0, %c0_i32, %c0_i32_0 : i32, i32, i32
  }
  func.func @transform_3(%arg0: i32, %arg1: i32) -> (i32, i32, i32) {
    %c0_i32 = arith.constant 0 : i32
    %c0_i32_0 = arith.constant 0 : i32
    %c0_i32_1 = arith.constant 0 : i32
    return %arg0, %c0_i32, %c0_i32_0 : i32, i32, i32
  }
  func.func @transform_4(%arg0: i32, %arg1: i32) -> (i32, i32, i32) {
    %c0_i32 = arith.constant 0 : i32
    %c0_i32_0 = arith.constant 0 : i32
    %c0_i32_1 = arith.constant 0 : i32
    return %arg0, %c0_i32, %c0_i32_0 : i32, i32, i32
  }
  func.func @transform_5(%arg0: i32, %arg1: i32) -> (i32, i32, i32, i32) {
    %c0_i32 = arith.constant 0 : i32
    %c0_i32_0 = arith.constant 0 : i32
    %c0_i32_1 = arith.constant 0 : i32
    return %arg0, %arg1, %c0_i32, %c0_i32_0 : i32, i32, i32, i32
  }
  func.func @transform_6(%arg0: i32, %arg1: i32) -> (i32, i32, i32) {
    %c0_i32 = arith.constant 0 : i32
    %c0_i32_0 = arith.constant 0 : i32
    %c0_i32_1 = arith.constant 0 : i32
    return %arg0, %c0_i32, %c0_i32_0 : i32, i32, i32
  }
}

</mosaic_0001>

<llo_original>
// kernel: tpu_custom_call.1
$region0: #{tpu_custom_call.1}
  #allocation0 [shape = 'u32[]', space=smem, size = 0x4, offset = 0x4, fixed_abs, tag = 'smem constant byte address 0x4 - core index']
  #allocation1 [shape = 'u32[144,128]{1,0:T(1,128)}', space=vmem, size = 0x12000, scoped, tag = 'internal scratch']
  #allocation2 [shape = 'f32[8,128]{1,0:T(8,128)}', space=vmem, size = 0x1000, scoped, tag = 'scratch operand']
  %s0 = inlined_call_operand.hbm [shape: f32[2,8,8,384], index: 0, kind: input, shape index: {}]
  %s1 = inlined_call_operand.vmem [shape: f32[2,8,8,1], index: 1, kind: input, shape index: {}]
  %s2 = inlined_call_operand.hbm [shape: f32[2,128,384], index: 2, kind: input, shape index: {}]
  %s3 = inlined_call_operand.vmem [shape: f32[2,1,128], index: 3, kind: input, shape index: {}]
  %s4 = inlined_call_operand.vmem [shape: f32[2,8,128], index: 4, kind: input, shape index: {}]
  %s5 = inlined_call_operand.hbm [shape: f32[2,8,8,128], index: 5, kind: output, shape index: {0}]
  %s6 = inlined_call_operand.hbm [shape: f32[2,8,128], index: 6, kind: output, shape index: {1}]
  %7 = xla_tuple %s5, %s6
  %s8 = sld [smem:[#allocation0]]
  $region77: #{tpu_custom_call.1} parent=0
    _
  %s10 = ssub.s32 1, %s8
  %s11 = scalar_select 0, %s10, %s8
  $region1: #{tpu_custom_call.1} parent=0
    #allocation3 [shape = 'u8[196608]{0}', space=vmem, size = 0x30000, scoped, tag = 'input window, operand 0']
    #allocation4 [shape = 's32[2]{0}', space=sflag, size = 0x8, scoped, tag = 'scoped memory for tpu_custom_call.1']
    #allocation5 [shape = 's32[2]{0}', space=sflag, size = 0x8, scoped, tag = 'scoped memory for tpu_custom_call.1']
    #allocation6 [shape = 'u8[393216]{0}', space=vmem, size = 0x60000, scoped, tag = 'input window, operand 2']
    #allocation7 [shape = 's32[2]{0}', space=sflag, size = 0x8, scoped, tag = 'scoped memory for tpu_custom_call.1']
    #allocation8 [shape = 'u8[65536]{0}', space=vmem, size = 0x10000, scoped, tag = 'output window, operand 0']
    #allocation9 [shape = 'u8[8192]{0}', space=vmem, size = 0x2000, scoped, tag = 'output window, operand 1']
    #allocation10 [shape = 's32[2]{0}', space=sflag, size = 0x8, scoped, tag = 'scoped memory for tpu_custom_call.1']
    %12 = vsyncpa [#allocation4], 0
    %s13 = scalar_lea.sflag [#allocation4], 1
    %14 = vsyncpa %s13, 0
    %15 = vsyncpa [#allocation7], 0
    %s16 = scalar_lea.sflag [#allocation7], 1
    %17 = vsyncpa %s16, 0
    %18 = vsyncpa [#allocation5], 0
    %s19 = scalar_lea.sflag [#allocation5], 1
    %20 = vsyncpa %s19, 0
    %21 = vsyncpa [#allocation10], 0
    %s22 = scalar_lea.sflag [#allocation10], 1
    %23 = vsyncpa %s22, 0
    loop: start=0, step=1, limit=4
    $region2: #{tpu_custom_call.1} parent=1 // loop_pre_header
      _
    $region3: #{tpu_custom_call.1} parent=1 // loop_header
      %s25 = sphi 0, %s29
      %p26 = scmp.ge.s32.totalorder %s25, 4
      %s32 = sphi 0, %s44
      %s33 = sphi 0, %s40
      %s34 = sphi 0, %s32
      %s35 = sphi 0, %s33
      %s36 = sphi 0, %s34
      %s37 = sphi 0, %s35
      %s49 = sphi 0, %s51
      %s52 = sphi 0, %s49
      %s53 = sphi 0, %s52
      %s69 = sphi 0, %s53
      %s77 = sphi 0, %s79
      %s80 = sphi 0, %s77
      %s81 = sphi 0, %s80
      %s97 = sphi 0, %s81
      %s103 = sphi 0, %s105
      %s106 = sphi 0, %s103
      %s107 = sphi 0, %s106
      %s123 = sphi 0, %s107
      %s129 = sphi 0, %s131
      %s132 = sphi 0, %s129
      %s133 = sphi 0, %s132
      %s149 = sphi 0, %s133
      %s155 = sphi 0, %s157
      %s158 = sphi 0, %s155
      %s159 = sphi 0, %s158
      %s175 = sphi 0, %s159
      %s183 = sphi 0, %s185
      %s186 = sphi 0, %s183
      %s187 = sphi 0, %s186
      %s203 = sphi 0, %s187
      %s209 = sphi 0, %s211
      %s212 = sphi 0, %s209
      %s213 = sphi 0, %s212
      %s229 = sphi 0, %s213
    $region4: #{tpu_custom_call.1} parent=1 // loop_header_branch
      %28 = sbr.rel (%p26) target = $region8
    $region5: #{tpu_custom_call.1} parent=1 // loop_body
      %s30 = ssub.s32 %s25, 1
      %s31 = ssub.s32 %s25, 2
      %s38 = sadd.s32 1, %s33
      %p39 = scmp.ge.s32.totalorder %s38, 1
      %s40 = scalar_select %p39, 0, %s38
      %s41 = sadd.s32 1, %s32
      %s42 = scalar_select %p39, %s41, %s32
      %p43 = scmp.ge.s32.totalorder %s42, 2
      %s44 = scalar_select %p43, 0, %s42
      %s45 = ssub.s32 %s32, %s44
      %s46 = ssub.s32 %s33, %s40
      %s47 = sor.u32 %s45, %s46
      %p48 = scmp.eq.s32.totalorder %s47, 0
      %s50 = sadd.s32 %s49, 1
      %s51 = scalar_select %p48, %s49, %s50
      %p54 = pneg %p48
      %p55 = scmp.eq.s32.totalorder %s25, 1
      %p56 = por %p54, %p55
      %p57 = scmp.ne.s32.totalorder %s49, %s52
      %p58 = scmp.eq.s32.totalorder %s25, 0
      %p59 = por %p57, %p58
      %p60 = scmp.ne.s32.totalorder %s49, %s52
      %p61 = scmp.eq.s32.totalorder %s30, 1
      %p62 = por %p60, %p61
      %p63 = scmp.ne.s32.totalorder %s52, %s53
      %p64 = scmp.eq.s32.totalorder %s30, 0
      %p65 = por %p63, %p64
      %p66 = scmp.ne.s32.totalorder %s52, %s53
      %p67 = scmp.eq.s32.totalorder %s31, 1
      %p68 = por %p66, %p67
      %p70 = scmp.ne.s32.totalorder %s53, %s69
      %p71 = scmp.eq.s32.totalorder %s31, 0
      %p72 = por %p70, %p71
      %s73 = ssub.s32 %s32, %s44
      %s74 = ssub.s32 %s33, %s40
      %s75 = sor.u32 %s73, %s74
      %p76 = scmp.eq.s32.totalorder %s75, 0
      %s78 = sadd.s32 %s77, 1
      %s79 = scalar_select %p76, %s77, %s78
      %p82 = pneg %p76
      %p83 = scmp.eq.s32.totalorder %s25, 1
      %p84 = por %p82, %p83
      %p85 = scmp.ne.s32.totalorder %s77, %s80
      %p86 = scmp.eq.s32.totalorder %s25, 0
      %p87 = por %p85, %p86
      %p88 = scmp.ne.s32.totalorder %s77, %s80
      %p89 = scmp.eq.s32.totalorder %s30, 1
      %p90 = por %p88, %p89
      %p91 = scmp.ne.s32.totalorder %s80, %s81
      %p92 = scmp.eq.s32.totalorder %s30, 0
      %p93 = por %p91, %p92
      %p94 = scmp.ne.s32.totalorder %s80, %s81
      %p95 = scmp.eq.s32.totalorder %s31, 1
      %p96 = por %p94, %p95
      %p98 = scmp.ne.s32.totalorder %s81, %s97
      %p99 = scmp.eq.s32.totalorder %s31, 0
      %p100 = por %p98, %p99
      %s101 = ssub.s32 %s32, %s44
      %p102 = scmp.eq.s32.totalorder %s101, 0
      %s104 = sadd.s32 %s103, 1
      %s105 = scalar_select %p102, %s103, %s104
      %p108 = pneg %p102
      %p109 = scmp.eq.s32.totalorder %s25, 1
      %p110 = por %p108, %p109
      %p111 = scmp.ne.s32.totalorder %s103, %s106
      %p112 = scmp.eq.s32.totalorder %s25, 0
      %p113 = por %p111, %p112
      %p114 = scmp.ne.s32.totalorder %s103, %s106
      %p115 = scmp.eq.s32.totalorder %s30, 1
      %p116 = por %p114, %p115
      %p117 = scmp.ne.s32.totalorder %s106, %s107
      %p118 = scmp.eq.s32.totalorder %s30, 0
      %p119 = por %p117, %p118
      %p120 = scmp.ne.s32.totalorder %s106, %s107
      %p121 = scmp.eq.s32.totalorder %s31, 1
      %p122 = por %p120, %p121
      %p124 = scmp.ne.s32.totalorder %s107, %s123
      %p125 = scmp.eq.s32.totalorder %s31, 0
      %p126 = por %p124, %p125
      %s127 = ssub.s32 %s32, %s44
      %p128 = scmp.eq.s32.totalorder %s127, 0
      %s130 = sadd.s32 %s129, 1
      %s131 = scalar_select %p128, %s129, %s130
      %p134 = pneg %p128
      %p135 = scmp.eq.s32.totalorder %s25, 1
      %p136 = por %p134, %p135
      %p137 = scmp.ne.s32.totalorder %s129, %s132
      %p138 = scmp.eq.s32.totalorder %s25, 0
      %p139 = por %p137, %p138
      %p140 = scmp.ne.s32.totalorder %s129, %s132
      %p141 = scmp.eq.s32.totalorder %s30, 1
      %p142 = por %p140, %p141
      %p143 = scmp.ne.s32.totalorder %s132, %s133
      %p144 = scmp.eq.s32.totalorder %s30, 0
      %p145 = por %p143, %p144
      %p146 = scmp.ne.s32.totalorder %s132, %s133
      %p147 = scmp.eq.s32.totalorder %s31, 1
      %p148 = por %p146, %p147
      %p150 = scmp.ne.s32.totalorder %s133, %s149
      %p151 = scmp.eq.s32.totalorder %s31, 0
      %p152 = por %p150, %p151
      %s153 = ssub.s32 %s32, %s44
      %p154 = scmp.eq.s32.totalorder %s153, 0
      %s156 = sadd.s32 %s155, 1
      %s157 = scalar_select %p154, %s155, %s156
      %p160 = pneg %p154
      %p161 = scmp.eq.s32.totalorder %s25, 1
      %p162 = por %p160, %p161
      %p163 = scmp.ne.s32.totalorder %s155, %s158
      %p164 = scmp.eq.s32.totalorder %s25, 0
      %p165 = por %p163, %p164
      %p166 = scmp.ne.s32.totalorder %s155, %s158
      %p167 = scmp.eq.s32.totalorder %s30, 1
      %p168 = por %p166, %p167
      %p169 = scmp.ne.s32.totalorder %s158, %s159
      %p170 = scmp.eq.s32.totalorder %s30, 0
      %p171 = por %p169, %p170
      %p172 = scmp.ne.s32.totalorder %s158, %s159
      %p173 = scmp.eq.s32.totalorder %s31, 1
      %p174 = por %p172, %p173
      %p176 = scmp.ne.s32.totalorder %s159, %s175
      %p177 = scmp.eq.s32.totalorder %s31, 0
      %p178 = por %p176, %p177
      %s179 = ssub.s32 %s32, %s44
      %s180 = ssub.s32 %s33, %s40
      %s181 = sor.u32 %s179, %s180
      %p182 = scmp.eq.s32.totalorder %s181, 0
      %s184 = sadd.s32 %s183, 1
      %s185 = scalar_select %p182, %s183, %s184
      %p188 = pneg %p182
      %p189 = scmp.eq.s32.totalorder %s25, 1
      %p190 = por %p188, %p189
      %p191 = scmp.ne.s32.totalorder %s183, %s186
      %p192 = scmp.eq.s32.totalorder %s25, 0
      %p193 = por %p191, %p192
      %p194 = scmp.ne.s32.totalorder %s183, %s186
      %p195 = scmp.eq.s32.totalorder %s30, 1
      %p196 = por %p194, %p195
      %p197 = scmp.ne.s32.totalorder %s186, %s187
      %p198 = scmp.eq.s32.totalorder %s30, 0
      %p199 = por %p197, %p198
      %p200 = scmp.ne.s32.totalorder %s186, %s187
      %p201 = scmp.eq.s32.totalorder %s31, 1
      %p202 = por %p200, %p201
      %p204 = scmp.ne.s32.totalorder %s187, %s203
      %p205 = scmp.eq.s32.totalorder %s31, 0
      %p206 = por %p204, %p205
      %s207 = ssub.s32 %s32, %s44
      %p208 = scmp.eq.s32.totalorder %s207, 0
      %s210 = sadd.s32 %s209, 1
      %s211 = scalar_select %p208, %s209, %s210
      %p214 = pneg %p208
      %p215 = scmp.eq.s32.totalorder %s25, 1
      %p216 = por %p214, %p215
      %p217 = scmp.ne.s32.totalorder %s209, %s212
      %p218 = scmp.eq.s32.totalorder %s25, 0
      %p219 = por %p217, %p218
      %p220 = scmp.ne.s32.totalorder %s209, %s212
      %p221 = scmp.eq.s32.totalorder %s30, 1
      %p222 = por %p220, %p221
      %p223 = scmp.ne.s32.totalorder %s212, %s213
      %p224 = scmp.eq.s32.totalorder %s30, 0
      %p225 = por %p223, %p224
      %p226 = scmp.ne.s32.totalorder %s212, %s213
      %p227 = scmp.eq.s32.totalorder %s31, 1
      %p228 = por %p226, %p227
      %p230 = scmp.ne.s32.totalorder %s213, %s229
      %p231 = scmp.eq.s32.totalorder %s31, 0
      %p232 = por %p230, %p231
      %p233 = scmp.le.s32.totalorder 1, %s25
      %p234 = scmp.lt.s32.totalorder %s25, 3
      %p235 = pnand %p233, %p234
      %p236 = pneg %p235
      // Predicated region
      $region9: #{tpu_custom_call.1} parent=5 // pred_check
        _
      $region10: #{tpu_custom_call.1} parent=5 // pred_check_branch
        %238 = sbr.rel (%p235) target = $region12
      $region11: #{tpu_custom_call.1} parent=5 // pred_region
        %s239 = ssub.s32 %s25, 1
      $region12: #{tpu_custom_call.1} parent=5 // pred_fallthru
        _
      %p240 = scmp.lt.s32.totalorder %s25, 2
      // Predicated region
      $region13: #{tpu_custom_call.1} parent=5 // pred_check
        %p241 = pneg %p240
      $region14: #{tpu_custom_call.1} parent=5 // pred_check_branch
        %243 = sbr.rel (%p241) target = $region16
      $region15: #{tpu_custom_call.1} parent=5 // pred_region
        // Predicated region
        $region17: #{tpu_custom_call.1} parent=15 // pred_check
          %p244 = pneg %p59
        $region18: #{tpu_custom_call.1} parent=15 // pred_check_branch
          %246 = sbr.rel (%p244) target = $region20
        $region19: #{tpu_custom_call.1} parent=15 // pred_region
          %s247 = sand.u32 %s49, 1
          %s248 = scalar_lea.sflag [#allocation4], %s247
          %s249 = sand.u32 %s49, 1
          %s250 = smul.addr %s249, 192
          %s251 = scalar_lea.vmem [#allocation3], %s250
          %s252 = smul.u32 8, %s33
          %s254 = ssub.s32 3072, 3072
          %255 = vsyncadd %s248, %s254
          %s256 = smul.addr %s252, 3
          %s257 = smul.addr %s32, 24
          %s258 = sadd.s32 %s256, %s257
          %s259 = smul.addr %s258, 128
          %s260 = scalar_lea.hbm %s0, %s259
          %s261 = sshll.u32 %s251, 4
          %s262 = int_to_ptr.vmem [resolvable:$true] %s261
          %267 = dma.hbm_to_vmem [thread:$0]  %s260, 3072, %s262, %s248, 384, 384, 24
        $region20: #{tpu_custom_call.1} parent=15 // pred_fallthru
          _
        // Predicated region
        $region21: #{tpu_custom_call.1} parent=15 // pred_check
          %p268 = pneg %p87
        $region22: #{tpu_custom_call.1} parent=15 // pred_check_branch
          %270 = sbr.rel (%p268) target = $region24
        $region23: #{tpu_custom_call.1} parent=15 // pred_region
          %s271 = smul.u32 8, %s33
          %p272 = scmp.lt.s32.totalorder %s32, 1
          %s273 = scalar_select %p272, %s32, 1
          %p274 = scmp.lt.s32.totalorder %s271, 7
          %s275 = scalar_select %p274, %s271, 7
          %s276 = smul.addr %s273, 8
          %s277 = sadd.s32 %s275, %s276
          %s278 = smul.addr %s277, 8
          %s279 = scalar_lea.vmem %s1, %s278
          %s280 = smul.u32 8, %s33
        $region24: #{tpu_custom_call.1} parent=15 // pred_fallthru
          _
        // Predicated region
        $region25: #{tpu_custom_call.1} parent=15 // pred_check
          %p281 = pneg %p113
        $region26: #{tpu_custom_call.1} parent=15 // pred_check_branch
          %283 = sbr.rel (%p281) target = $region28
        $region27: #{tpu_custom_call.1} parent=15 // pred_region
          %s284 = sand.u32 %s103, 1
          %s285 = scalar_lea.sflag [#allocation7], %s284
          %s286 = sand.u32 %s103, 1
          %s287 = smul.addr %s286, 384
          %s288 = scalar_lea.vmem [#allocation6], %s287
          %s290 = ssub.s32 6144, 6144
          %291 = vsyncadd %s285, %s290
          %s292 = smul.addr %s32, 48
          %s293 = smul.addr %s292, 128
          %s294 = scalar_lea.hbm %s2, %s293
          %s295 = sshll.u32 %s288, 4
          %s296 = int_to_ptr.vmem [resolvable:$true] %s295
          %301 = dma.hbm_to_vmem [thread:$0]  %s294, 6144, %s296, %s285, 384, 384, 24
        $region28: #{tpu_custom_call.1} parent=15 // pred_fallthru
          _
        // Predicated region
        $region29: #{tpu_custom_call.1} parent=15 // pred_check
          %p302 = pneg %p139
        $region30: #{tpu_custom_call.1} parent=15 // pred_check_branch
          %304 = sbr.rel (%p302) target = $region32
        $region31: #{tpu_custom_call.1} parent=15 // pred_region
          %p305 = scmp.lt.s32.totalorder %s32, 1
          %s306 = scalar_select %p305, %s32, 1
          %s307 = scalar_lea.vmem %s3, %s306
        $region32: #{tpu_custom_call.1} parent=15 // pred_fallthru
          _
        // Predicated region
        $region33: #{tpu_custom_call.1} parent=15 // pred_check
          %p308 = pneg %p165
        $region34: #{tpu_custom_call.1} parent=15 // pred_check_branch
          %310 = sbr.rel (%p308) target = $region36
        $region35: #{tpu_custom_call.1} parent=15 // pred_region
          %p311 = scmp.lt.s32.totalorder %s32, 1
          %s312 = scalar_select %p311, %s32, 1
          %s313 = smul.addr %s312, 8
          %s314 = scalar_lea.vmem %s4, %s313
        $region36: #{tpu_custom_call.1} parent=15 // pred_fallthru
          _
      $region16: #{tpu_custom_call.1} parent=5 // pred_fallthru
        _
      %p315 = scmp.le.s32.totalorder 1, %s25
      %p316 = scmp.lt.s32.totalorder %s25, 3
      %p317 = pnand %p315, %p316
      %p318 = pneg %p317
      // Predicated region
      $region37: #{tpu_custom_call.1} parent=5 // pred_check
        _
      $region38: #{tpu_custom_call.1} parent=5 // pred_check_branch
        %320 = sbr.rel (%p317) target = $region40
      $region39: #{tpu_custom_call.1} parent=5 // pred_region
        %s321 = ssub.s32 %s25, 1
        %s322 = sand.u32 %s52, 1
        %s323 = scalar_lea.sflag [#allocation4], %s322
        %s324 = sand.u32 %s52, 1
        %s325 = smul.addr %s324, 192
        %s326 = scalar_lea.vmem [#allocation3], %s325
        // Predicated region
        $region41: #{tpu_custom_call.1} parent=39 // pred_check
          %p327 = pneg %p65
        $region42: #{tpu_custom_call.1} parent=39 // pred_check_branch
          %329 = sbr.rel (%p327) target = $region44
        $region43: #{tpu_custom_call.1} parent=39 // pred_region
          %330 = dma.done %s323, 3072
        $region44: #{tpu_custom_call.1} parent=39 // pred_fallthru
          _
        %s331 = sand.u32 %s106, 1
        %s332 = scalar_lea.sflag [#allocation7], %s331
        %s333 = sand.u32 %s106, 1
        %s334 = smul.addr %s333, 384
        %s335 = scalar_lea.vmem [#allocation6], %s334
        // Predicated region
        $region45: #{tpu_custom_call.1} parent=39 // pred_check
          %p336 = pneg %p119
        $region46: #{tpu_custom_call.1} parent=39 // pred_check_branch
          %338 = sbr.rel (%p336) target = $region48
        $region47: #{tpu_custom_call.1} parent=39 // pred_region
          %339 = dma.done %s332, 6144
        $region48: #{tpu_custom_call.1} parent=39 // pred_fallthru
          _
        %s340 = sand.u32 %s52, 1
        %s341 = scalar_lea.sflag [#allocation4], %s340
        %s342 = sand.u32 %s52, 1
        %s343 = smul.addr %s342, 192
        %s344 = scalar_lea.vmem [#allocation3], %s343
        %p345 = pneg %p65
        %p346 = pneg %p62
        %s347 = smul.u32 8, %s35
        %p348 = scmp.lt.s32.totalorder %s34, 1
        %s349 = scalar_select %p348, %s34, 1
        %p350 = scmp.lt.s32.totalorder %s347, 7
        %s351 = scalar_select %p350, %s347, 7
        %s352 = smul.addr %s349, 8
        %s353 = sadd.s32 %s351, %s352
        %s354 = smul.addr %s353, 8
        %s355 = scalar_lea.vmem %s1, %s354
        %p356 = pneg %p93
        %p357 = pneg %p90
        %s358 = sand.u32 %s106, 1
        %s359 = scalar_lea.sflag [#allocation7], %s358
        %s360 = sand.u32 %s106, 1
        %s361 = smul.addr %s360, 384
        %s362 = scalar_lea.vmem [#allocation6], %s361
        %p363 = pneg %p119
        %p364 = pneg %p116
        %p365 = scmp.lt.s32.totalorder %s34, 1
        %s366 = scalar_select %p365, %s34, 1
        %s367 = scalar_lea.vmem %s3, %s366
        %p368 = pneg %p145
        %p369 = pneg %p142
        %p370 = scmp.lt.s32.totalorder %s34, 1
        %s371 = scalar_select %p370, %s34, 1
        %s372 = smul.addr %s371, 8
        %s373 = scalar_lea.vmem %s4, %s372
        %p374 = pneg %p171
        %p375 = pneg %p168
        %p376 = pneg %p199
        %p377 = pneg %p196
        %s378 = sand.u32 %s186, 1
        %s379 = scalar_lea.sflag [#allocation5], %s378
        %s380 = sand.u32 %s186, 1
        %s381 = smul.addr %s380, 64
        %s382 = scalar_lea.vmem [#allocation8], %s381
        %p383 = pneg %p225
        %p384 = pneg %p222
        %s385 = sand.u32 %s212, 1
        %s386 = scalar_lea.sflag [#allocation10], %s385
        %s387 = sand.u32 %s212, 1
        %s388 = smul.addr %s387, 8
        %s389 = scalar_lea.vmem [#allocation9], %s388
        %s390 = smul.u32 8, %s35
        %s391 = smul.u32 8, %s35
        %p392 = scmp.lt.s32.totalorder %s34, 1
        %s393 = scalar_select %p392, %s34, 1
        %p394 = scmp.lt.s32.totalorder %s391, 7
        %s395 = scalar_select %p394, %s391, 7
        %s396 = smul.addr %s393, 8
        %s397 = sadd.s32 %s395, %s396
        %s398 = smul.addr %s397, 8
        %s399 = scalar_lea.vmem %s1, %s398
        %s400 = smul.u32 8, %s35
        %p401 = scmp.lt.s32.totalorder %s34, 1
        %s402 = scalar_select %p401, %s34, 1
        %s403 = scalar_lea.vmem %s3, %s402
        %p404 = scmp.lt.s32.totalorder %s34, 1
        %s405 = scalar_select %p404, %s34, 1
        %s406 = smul.addr %s405, 8
        %s407 = scalar_lea.vmem %s4, %s406
        %s408 = smul.u32 8, %s35
        %p409 = scmp.eq.s32.totalorder %s35, 0
        // Predicated region
        $region49: #{tpu_custom_call.1} parent=39 // pred_check
          %p410 = pneg %p409
        $region50: #{tpu_custom_call.1} parent=39 // pred_check_branch
          %412 = sbr.rel (%p410) target = $region52
        $region51: #{tpu_custom_call.1} parent=39 // pred_region
          %v413 = vld [vmem:[%s407] sm:$0xff]
          %414 = vst [vmem:[#allocation2] sm:$0xff] %v413
        $region52: #{tpu_custom_call.1} parent=39 // pred_fallthru
          _
        %v415 = vld [vmem:[%s335] sm:$0xff]
        %v416 = vld [vmem:[%s335 + $0x8] sm:$0xff]
        %v417 = vld [vmem:[%s335 + $0x10] sm:$0xff]
        %v418 = vld [vmem:[%s335 + $0x18] sm:$0xff]
        %v419 = vld [vmem:[%s335 + $0x20] sm:$0xff]
        %v420 = vld [vmem:[%s335 + $0x28] sm:$0xff]
        %v421 = vld [vmem:[%s335 + $0x30] sm:$0xff]
        %v422 = vld [vmem:[%s335 + $0x38] sm:$0xff]
        %v423 = vld [vmem:[%s335 + $0x40] sm:$0xff]
        %v424 = vld [vmem:[%s335 + $0x48] sm:$0xff]
        %v425 = vld [vmem:[%s335 + $0x50] sm:$0xff]
        %v426 = vld [vmem:[%s335 + $0x58] sm:$0xff]
        %v427 = vld [vmem:[%s335 + $0x60] sm:$0xff]
        %v428 = vld [vmem:[%s335 + $0x68] sm:$0xff]
        %v429 = vld [vmem:[%s335 + $0x70] sm:$0xff]
        %v430 = vld [vmem:[%s335 + $0x78] sm:$0xff]
        %v431 = vld [vmem:[%s335 + $0x80] sm:$0xff]
        %v432 = vld [vmem:[%s335 + $0x88] sm:$0xff]
        %v433 = vld [vmem:[%s335 + $0x90] sm:$0xff]
        %v434 = vld [vmem:[%s335 + $0x98] sm:$0xff]
        %v435 = vld [vmem:[%s335 + $0xa0] sm:$0xff]
        %v436 = vld [vmem:[%s335 + $0xa8] sm:$0xff]
        %v437 = vld [vmem:[%s335 + $0xb0] sm:$0xff]
        %v438 = vld [vmem:[%s335 + $0xb8] sm:$0xff]
        %v439 = vld [vmem:[%s335 + $0xc0] sm:$0xff]
        %v440 = vld [vmem:[%s335 + $0xc8] sm:$0xff]
        %v441 = vld [vmem:[%s335 + $0xd0] sm:$0xff]
        %v442 = vld [vmem:[%s335 + $0xd8] sm:$0xff]
        %v443 = vld [vmem:[%s335 + $0xe0] sm:$0xff]
        %v444 = vld [vmem:[%s335 + $0xe8] sm:$0xff]
        %v445 = vld [vmem:[%s335 + $0xf0] sm:$0xff]
        %v446 = vld [vmem:[%s335 + $0xf8] sm:$0xff]
        %v447 = vld [vmem:[%s335 + $0x100] sm:$0xff]
        %v448 = vld [vmem:[%s335 + $0x108] sm:$0xff]
        %v449 = vld [vmem:[%s335 + $0x110] sm:$0xff]
        %v450 = vld [vmem:[%s335 + $0x118] sm:$0xff]
        %v451 = vld [vmem:[%s335 + $0x120] sm:$0xff]
        %v452 = vld [vmem:[%s335 + $0x128] sm:$0xff]
        %v453 = vld [vmem:[%s335 + $0x130] sm:$0xff]
        %v454 = vld [vmem:[%s335 + $0x138] sm:$0xff]
        %v455 = vld [vmem:[%s335 + $0x140] sm:$0xff]
        %v456 = vld [vmem:[%s335 + $0x148] sm:$0xff]
        %v457 = vld [vmem:[%s335 + $0x150] sm:$0xff]
        %v458 = vld [vmem:[%s335 + $0x158] sm:$0xff]
        %v459 = vld [vmem:[%s335 + $0x160] sm:$0xff]
        %v460 = vld [vmem:[%s335 + $0x168] sm:$0xff]
        %v461 = vld [vmem:[%s335 + $0x170] sm:$0xff]
        %v462 = vld [vmem:[%s335 + $0x178] sm:$0xff]
        %v463 = vld [vmem:[%s403] sm:$0x1]
        %v465 = vlaneseq
        %v466 = vshrl.u32 %v465, 7
        %v467 = vsub.s32 0, %v466
        %v468 = vrot.slane %v463, %v467
        %v470 = vld [vmem:[#allocation2] sm:$0xff]
        %v471 = vld [vmem:[%s326] sm:$0xff]
        %v472 = vld [vmem:[%s326 + $0x8] sm:$0xff]
        %v473 = vld [vmem:[%s326 + $0x10] sm:$0xff]
        %474 = vmatprep.subr.mxu0 %v416
        %475 = vmatpush1.msra.mxu0 %v415
        %476 = vmatprep.subr.mxu0 %v419
        %477 = vmatpush1.msra.mxu0 %v418
        %478 = vmatprep.subr.mxu0 %v422
        %479 = vmatpush1.msra.mxu0 %v421
        %480 = vmatprep.subr.mxu0 %v425
        %481 = vmatpush1.msra.mxu0 %v424
        %482 = vmatprep.subr.mxu0 %v428
        %483 = vmatpush1.msra.mxu0 %v427
        %484 = vmatprep.subr.mxu0 %v431
        %485 = vmatpush1.msra.mxu0 %v430
        %486 = vmatprep.subr.mxu0 %v434
        %487 = vmatpush1.msra.mxu0 %v433
        %488 = vmatprep.subr.mxu0 %v437
        %489 = vmatpush1.msra.mxu0 %v436
        %490 = vmatprep.subr.mxu0 %v440
        %491 = vmatpush1.msra.mxu0 %v439
        %492 = vmatprep.subr.mxu0 %v443
        %493 = vmatpush1.msra.mxu0 %v442
        %494 = vmatprep.subr.mxu0 %v446
        %495 = vmatpush1.msra.mxu0 %v445
        %496 = vmatprep.subr.mxu0 %v449
        %497 = vmatpush1.msra.mxu0 %v448
        %498 = vmatprep.subr.mxu0 %v452
        %499 = vmatpush1.msra.mxu0 %v451
        %500 = vmatprep.subr.mxu0 %v455
        %501 = vmatpush1.msra.mxu0 %v454
        %502 = vmatprep.subr.mxu0 %v458
        %503 = vmatpush1.msra.mxu0 %v457
        %504 = vmatprep.subr.mxu0 %v461
        %505 = vmatpush1.msra.mxu0 %v460
        %506 = vmatprep.subr.mxu0 0.0
        %507 = vmatpush1.msra.mxu0 0.0
        %508 = vmatprep.subr.mxu0 0.0
        %509 = vmatpush1.msra.mxu0 0.0
        %510 = vmatprep.subr.mxu0 0.0
        %511 = vmatpush1.msra.mxu0 0.0
        %512 = vmatprep.subr.mxu0 0.0
        %513 = vmatpush1.msra.mxu0 0.0
        %514 = vmatprep.subr.mxu0 0.0
        %515 = vmatpush1.msra.mxu0 0.0
        %516 = vmatprep.subr.mxu0 0.0
        %517 = vmatpush1.msra.mxu0 0.0
        %518 = vmatprep.subr.mxu0 0.0
        %519 = vmatpush1.msra.mxu0 0.0
        %520 = vmatprep.subr.mxu0 0.0
        %521 = vmatpush1.msra.mxu0 0.0
        %522 = vmatprep.subr.mxu0 0.0
        %523 = vmatpush1.msra.mxu0 0.0
        %524 = vmatprep.subr.mxu0 0.0
        %525 = vmatpush1.msra.mxu0 0.0
        %526 = vmatprep.subr.mxu0 0.0
        %527 = vmatpush1.msra.mxu0 0.0
        %528 = vmatprep.subr.mxu0 0.0
        %529 = vmatpush1.msra.mxu0 0.0
        %530 = vmatprep.subr.mxu0 0.0
        %531 = vmatpush1.msra.mxu0 0.0
        %532 = vmatprep.subr.mxu0 0.0
        %533 = vmatpush1.msra.mxu0 0.0
        %534 = vmatprep.subr.mxu0 0.0
        %535 = vmatpush1.msra.mxu0 0.0
        %536 = vmatprep.subr.mxu0 0.0
        %537 = vmatpush1.msra.mxu0 0.0
        %538 = vmatprep.mubr.f32.mxu0 0.0
        %539 = vmatmul.mubr.f32.gmra.mrb[0].mxu0 %v470
        %v540 = vpop.f32.mrb[0].mxu0
        %v541 = vadd.f32 0.0, %v540
        %v542 = vpop.f32.mrb[0].mxu0
        %v543 = vadd.f32 0.0, %v542
        %544 = vdwg.mxu0
        %545 = vmatprep.subr.mxu0 0.0
        %546 = vmatpush1.msra.mxu0 %v417
        %547 = vmatprep.subr.mxu0 0.0
        %548 = vmatpush1.msra.mxu0 %v420
        %549 = vmatprep.subr.mxu0 0.0
        %550 = vmatpush1.msra.mxu0 %v423
        %551 = vmatprep.subr.mxu0 0.0
        %552 = vmatpush1.msra.mxu0 %v426
        %553 = vmatprep.subr.mxu0 0.0
        %554 = vmatpush1.msra.mxu0 %v429
        %555 = vmatprep.subr.mxu0 0.0
        %556 = vmatpush1.msra.mxu0 %v432
        %557 = vmatprep.subr.mxu0 0.0
        %558 = vmatpush1.msra.mxu0 %v435
        %559 = vmatprep.subr.mxu0 0.0
        %560 = vmatpush1.msra.mxu0 %v438
        %561 = vmatprep.subr.mxu0 0.0
        %562 = vmatpush1.msra.mxu0 %v441
        %563 = vmatprep.subr.mxu0 0.0
        %564 = vmatpush1.msra.mxu0 %v444
        %565 = vmatprep.subr.mxu0 0.0
        %566 = vmatpush1.msra.mxu0 %v447
        %567 = vmatprep.subr.mxu0 0.0
        %568 = vmatpush1.msra.mxu0 %v450
        %569 = vmatprep.subr.mxu0 0.0
        %570 = vmatpush1.msra.mxu0 %v453
        %571 = vmatprep.subr.mxu0 0.0
        %572 = vmatpush1.msra.mxu0 %v456
        %573 = vmatprep.subr.mxu0 0.0
        %574 = vmatpush1.msra.mxu0 %v459
        %575 = vmatprep.subr.mxu0 0.0
        %576 = vmatpush1.msra.mxu0 %v462
        %577 = vmatprep.subr.mxu0 0.0
        %578 = vmatpush1.msra.mxu0 0.0
        %579 = vmatprep.subr.mxu0 0.0
        %580 = vmatpush1.msra.mxu0 0.0
        %581 = vmatprep.subr.mxu0 0.0
        %582 = vmatpush1.msra.mxu0 0.0
        %583 = vmatprep.subr.mxu0 0.0
        %584 = vmatpush1.msra.mxu0 0.0
        %585 = vmatprep.subr.mxu0 0.0
        %586 = vmatpush1.msra.mxu0 0.0
        %587 = vmatprep.subr.mxu0 0.0
        %588 = vmatpush1.msra.mxu0 0.0
        %589 = vmatprep.subr.mxu0 0.0
        %590 = vmatpush1.msra.mxu0 0.0
        %591 = vmatprep.subr.mxu0 0.0
        %592 = vmatpush1.msra.mxu0 0.0
        %593 = vmatprep.subr.mxu0 0.0
        %594 = vmatpush1.msra.mxu0 0.0
        %595 = vmatprep.subr.mxu0 0.0
        %596 = vmatpush1.msra.mxu0 0.0
        %597 = vmatprep.subr.mxu0 0.0
        %598 = vmatpush1.msra.mxu0 0.0
        %599 = vmatprep.subr.mxu0 0.0
        %600 = vmatpush1.msra.mxu0 0.0
        %601 = vmatprep.subr.mxu0 0.0
        %602 = vmatpush1.msra.mxu0 0.0
        %603 = vmatprep.subr.mxu0 0.0
        %604 = vmatpush1.msra.mxu0 0.0
        %605 = vmatprep.subr.mxu0 0.0
        %606 = vmatpush1.msra.mxu0 0.0
        %607 = vmatprep.subr.mxu0 0.0
        %608 = vmatpush1.msra.mxu0 0.0
        %609 = vmatprep.mubr.f32.mxu0 0.0
        %610 = vmatmul.mubr.f32.gmra.mrb[0].mxu0 %v470
        %v611 = vpop.f32.mrb[0].mxu0
        %v612 = vadd.f32 0.0, %v611
        %v613 = vpop.f32.mrb[0].mxu0
        %614 = vdwg.mxu0
        %v615 = vadd.f32 %v471, %v541
        %v616 = vxor.u32 %v615, 2147483648
        %v617 = vmul.f32 %v616, 1.442695
        %v618 = vpow.pop %v617
        %v619 = vadd.f32 %v618, 1.0
        %v620 = vrcp.pop %v619
        %v621 = vmul.f32 1.0, %v620
        %v622 = vadd.f32 %v472, %v543
        %v623 = vxor.u32 %v622, 2147483648
        %v624 = vmul.f32 %v623, 1.442695
        %v625 = vpow.pop %v624
        %v626 = vadd.f32 %v625, 1.0
        %v627 = vrcp.pop %v626
        %v628 = vmul.f32 1.0, %v627
        %v629 = vadd.f32 %v612, %v468
        %v630 = vmul.f32 %v621, %v629
        %v631 = vadd.f32 %v473, %v630
        %v632 = vtanh.pop %v631
        %v633 = vsub.f32 1.0, %v628
        %v634 = vmul.f32 %v633, %v632
        %v635 = vmul.f32 %v628, %v470
        %v636 = vadd.f32 %v634, %v635
        %v637 = vld [vmem:[%s399] sm:$0xff]
        %639 = vset.pattern.permute.xlu0 0
        %640 = vperm.xlu0 %639, %v637
        %v641 = vpop.permute.xlu0 %640
        %v643 = vmul.f32 %v641, %v636
        %644 = vst [vmem:[%s382] sm:$0xff] %v643
        %v645 = vsub.f32 1.0, %v637
        %647 = vset.pattern.permute.xlu0 0
        %648 = vperm.xlu0 %647, %v645
        %v649 = vpop.permute.xlu0 %648
        %v651 = vmul.f32 %v649, %v470
        %v652 = vadd.f32 %v643, %v651
        %s653 = scalar_lea.vmem %s326, 24 [#allocation3]
        %v654 = vld [vmem:[%s653] sm:$0xff]
        %v655 = vld [vmem:[%s653 + $0x8] sm:$0xff]
        %v656 = vld [vmem:[%s653 + $0x10] sm:$0xff]
        %657 = vmatprep.subr.mxu0 %v416
        %658 = vmatpush1.msra.mxu0 %v415
        %659 = vmatprep.subr.mxu0 %v419
        %660 = vmatpush1.msra.mxu0 %v418
        %661 = vmatprep.subr.mxu0 %v422
        %662 = vmatpush1.msra.mxu0 %v421
        %663 = vmatprep.subr.mxu0 %v425
        %664 = vmatpush1.msra.mxu0 %v424
        %665 = vmatprep.subr.mxu0 %v428
        %666 = vmatpush1.msra.mxu0 %v427
        %667 = vmatprep.subr.mxu0 %v431
        %668 = vmatpush1.msra.mxu0 %v430
        %669 = vmatprep.subr.mxu0 %v434
        %670 = vmatpush1.msra.mxu0 %v433
        %671 = vmatprep.subr.mxu0 %v437
        %672 = vmatpush1.msra.mxu0 %v436
        %673 = vmatprep.subr.mxu0 %v440
        %674 = vmatpush1.msra.mxu0 %v439
        %675 = vmatprep.subr.mxu0 %v443
        %676 = vmatpush1.msra.mxu0 %v442
        %677 = vmatprep.subr.mxu0 %v446
        %678 = vmatpush1.msra.mxu0 %v445
        %679 = vmatprep.subr.mxu0 %v449
        %680 = vmatpush1.msra.mxu0 %v448
        %681 = vmatprep.subr.mxu0 %v452
        %682 = vmatpush1.msra.mxu0 %v451
        %683 = vmatprep.subr.mxu0 %v455
        %684 = vmatpush1.msra.mxu0 %v454
        %685 = vmatprep.subr.mxu0 %v458
        %686 = vmatpush1.msra.mxu0 %v457
        %687 = vmatprep.subr.mxu0 %v461
        %688 = vmatpush1.msra.mxu0 %v460
        %689 = vmatprep.subr.mxu0 0.0
        %690 = vmatpush1.msra.mxu0 0.0
        %691 = vmatprep.subr.mxu0 0.0
        %692 = vmatpush1.msra.mxu0 0.0
        %693 = vmatprep.subr.mxu0 0.0
        %694 = vmatpush1.msra.mxu0 0.0
        %695 = vmatprep.subr.mxu0 0.0
        %696 = vmatpush1.msra.mxu0 0.0
        %697 = vmatprep.subr.mxu0 0.0
        %698 = vmatpush1.msra.mxu0 0.0
        %699 = vmatprep.subr.mxu0 0.0
        %700 = vmatpush1.msra.mxu0 0.0
        %701 = vmatprep.subr.mxu0 0.0
        %702 = vmatpush1.msra.mxu0 0.0
        %703 = vmatprep.subr.mxu0 0.0
        %704 = vmatpush1.msra.mxu0 0.0
        %705 = vmatprep.subr.mxu0 0.0
        %706 = vmatpush1.msra.mxu0 0.0
        %707 = vmatprep.subr.mxu0 0.0
        %708 = vmatpush1.msra.mxu0 0.0
        %709 = vmatprep.subr.mxu0 0.0
        %710 = vmatpush1.msra.mxu0 0.0
        %711 = vmatprep.subr.mxu0 0.0
        %712 = vmatpush1.msra.mxu0 0.0
        %713 = vmatprep.subr.mxu0 0.0
        %714 = vmatpush1.msra.mxu0 0.0
        %715 = vmatprep.subr.mxu0 0.0
        %716 = vmatpush1.msra.mxu0 0.0
        %717 = vmatprep.subr.mxu0 0.0
        %718 = vmatpush1.msra.mxu0 0.0
        %719 = vmatprep.subr.mxu0 0.0
        %720 = vmatpush1.msra.mxu0 0.0
        %721 = vmatprep.mubr.f32.mxu0 0.0
        %722 = vmatmul.mubr.f32.gmra.mrb[0].mxu0 %v652
        %v723 = vpop.f32.mrb[0].mxu0
        %v724 = vadd.f32 0.0, %v723
        %v725 = vpop.f32.mrb[0].mxu0
        %v726 = vadd.f32 0.0, %v725
        %727 = vdwg.mxu0
        %728 = vmatprep.subr.mxu0 0.0
        %729 = vmatpush1.msra.mxu0 %v417
        %730 = vmatprep.subr.mxu0 0.0
        %731 = vmatpush1.msra.mxu0 %v420
        %732 = vmatprep.subr.mxu0 0.0
        %733 = vmatpush1.msra.mxu0 %v423
        %734 = vmatprep.subr.mxu0 0.0
        %735 = vmatpush1.msra.mxu0 %v426
        %736 = vmatprep.subr.mxu0 0.0
        %737 = vmatpush1.msra.mxu0 %v429
        %738 = vmatprep.subr.mxu0 0.0
        %739 = vmatpush1.msra.mxu0 %v432
        %740 = vmatprep.subr.mxu0 0.0
        %741 = vmatpush1.msra.mxu0 %v435
        %742 = vmatprep.subr.mxu0 0.0
        %743 = vmatpush1.msra.mxu0 %v438
        %744 = vmatprep.subr.mxu0 0.0
        %745 = vmatpush1.msra.mxu0 %v441
        %746 = vmatprep.subr.mxu0 0.0
        %747 = vmatpush1.msra.mxu0 %v444
        %748 = vmatprep.subr.mxu0 0.0
        %749 = vmatpush1.msra.mxu0 %v447
        %750 = vmatprep.subr.mxu0 0.0
        %751 = vmatpush1.msra.mxu0 %v450
        %752 = vmatprep.subr.mxu0 0.0
        %753 = vmatpush1.msra.mxu0 %v453
        %754 = vmatprep.subr.mxu0 0.0
        %755 = vmatpush1.msra.mxu0 %v456
        %756 = vmatprep.subr.mxu0 0.0
        %757 = vmatpush1.msra.mxu0 %v459
        %758 = vmatprep.subr.mxu0 0.0
        %759 = vmatpush1.msra.mxu0 %v462
        %760 = vmatprep.subr.mxu0 0.0
        %761 = vmatpush1.msra.mxu0 0.0
        %762 = vmatprep.subr.mxu0 0.0
        %763 = vmatpush1.msra.mxu0 0.0
        %764 = vmatprep.subr.mxu0 0.0
        %765 = vmatpush1.msra.mxu0 0.0
        %766 = vmatprep.subr.mxu0 0.0
        %767 = vmatpush1.msra.mxu0 0.0
        %768 = vmatprep.subr.mxu0 0.0
        %769 = vmatpush1.msra.mxu0 0.0
        %770 = vmatprep.subr.mxu0 0.0
        %771 = vmatpush1.msra.mxu0 0.0
        %772 = vmatprep.subr.mxu0 0.0
        %773 = vmatpush1.msra.mxu0 0.0
        %774 = vmatprep.subr.mxu0 0.0
        %775 = vmatpush1.msra.mxu0 0.0
        %776 = vmatprep.subr.mxu0 0.0
        %777 = vmatpush1.msra.mxu0 0.0
        %778 = vmatprep.subr.mxu0 0.0
        %779 = vmatpush1.msra.mxu0 0.0
        %780 = vmatprep.subr.mxu0 0.0
        %781 = vmatpush1.msra.mxu0 0.0
        %782 = vmatprep.subr.mxu0 0.0
        %783 = vmatpush1.msra.mxu0 0.0
        %784 = vmatprep.subr.mxu0 0.0
        %785 = vmatpush1.msra.mxu0 0.0
        %786 = vmatprep.subr.mxu0 0.0
        %787 = vmatpush1.msra.mxu0 0.0
        %788 = vmatprep.subr.mxu0 0.0
        %789 = vmatpush1.msra.mxu0 0.0
        %790 = vmatprep.subr.mxu0 0.0
        %791 = vmatpush1.msra.mxu0 0.0
        %792 = vmatprep.mubr.f32.mxu0 0.0
        %793 = vmatmul.mubr.f32.gmra.mrb[0].mxu0 %v652
        %v794 = vpop.f32.mrb[0].mxu0
        %v795 = vadd.f32 0.0, %v794
        %v796 = vpop.f32.mrb[0].mxu0
        %797 = vdwg.mxu0
        %v798 = vadd.f32 %v654, %v724
        %v799 = vxor.u32 %v798, 2147483648
        %v800 = vmul.f32 %v799, 1.442695
        %v801 = vpow.pop %v800
        %v802 = vadd.f32 %v801, 1.0
        %v803 = vrcp.pop %v802
        %v804 = vmul.f32 1.0, %v803
        %v805 = vadd.f32 %v655, %v726
        %v806 = vxor.u32 %v805, 2147483648
        %v807 = vmul.f32 %v806, 1.442695
        %v808 = vpow.pop %v807
        %v809 = vadd.f32 %v808, 1.0
        %v810 = vrcp.pop %v809
        %v811 = vmul.f32 1.0, %v810
        %v812 = vadd.f32 %v795, %v468
        %v813 = vmul.f32 %v804, %v812
        %v814 = vadd.f32 %v656, %v813
        %v815 = vtanh.pop %v814
        %v816 = vsub.f32 1.0, %v811
        %v817 = vmul.f32 %v816, %v815
        %v818 = vmul.f32 %v811, %v652
        %v819 = vadd.f32 %v817, %v818
        %s820 = scalar_lea.vmem %s399, 8
        %v821 = vld [vmem:[%s820] sm:$0xff]
        %823 = vset.pattern.permute.xlu0 0
        %824 = vperm.xlu0 %823, %v821
        %v825 = vpop.permute.xlu0 %824
        %v827 = vmul.f32 %v825, %v819
        %s828 = scalar_lea.vmem %s382, 8 [#allocation8]
        %829 = vst [vmem:[%s828] sm:$0xff] %v827
        %v830 = vsub.f32 1.0, %v821
        %832 = vset.pattern.permute.xlu0 0
        %833 = vperm.xlu0 %832, %v830
        %v834 = vpop.permute.xlu0 %833
        %v836 = vmul.f32 %v834, %v652
        %v837 = vadd.f32 %v827, %v836
        %s838 = scalar_lea.vmem %s326, 48 [#allocation3]
        %v839 = vld [vmem:[%s838] sm:$0xff]
        %v840 = vld [vmem:[%s838 + $0x8] sm:$0xff]
        %v841 = vld [vmem:[%s838 + $0x10] sm:$0xff]
        %842 = vmatprep.subr.mxu0 %v416
        %843 = vmatpush1.msra.mxu0 %v415
        %844 = vmatprep.subr.mxu0 %v419
        %845 = vmatpush1.msra.mxu0 %v418
        %846 = vmatprep.subr.mxu0 %v422
        %847 = vmatpush1.msra.mxu0 %v421
        %848 = vmatprep.subr.mxu0 %v425
        %849 = vmatpush1.msra.mxu0 %v424
        %850 = vmatprep.subr.mxu0 %v428
        %851 = vmatpush1.msra.mxu0 %v427
        %852 = vmatprep.subr.mxu0 %v431
        %853 = vmatpush1.msra.mxu0 %v430
        %854 = vmatprep.subr.mxu0 %v434
        %855 = vmatpush1.msra.mxu0 %v433
        %856 = vmatprep.subr.mxu0 %v437
        %857 = vmatpush1.msra.mxu0 %v436
        %858 = vmatprep.subr.mxu0 %v440
        %859 = vmatpush1.msra.mxu0 %v439
        %860 = vmatprep.subr.mxu0 %v443
        %861 = vmatpush1.msra.mxu0 %v442
        %862 = vmatprep.subr.mxu0 %v446
        %863 = vmatpush1.msra.mxu0 %v445
        %864 = vmatprep.subr.mxu0 %v449
        %865 = vmatpush1.msra.mxu0 %v448
        %866 = vmatprep.subr.mxu0 %v452
        %867 = vmatpush1.msra.mxu0 %v451
        %868 = vmatprep.subr.mxu0 %v455
        %869 = vmatpush1.msra.mxu0 %v454
        %870 = vmatprep.subr.mxu0 %v458
        %871 = vmatpush1.msra.mxu0 %v457
        %872 = vmatprep.subr.mxu0 %v461
        %873 = vmatpush1.msra.mxu0 %v460
        %874 = vmatprep.subr.mxu0 0.0
        %875 = vmatpush1.msra.mxu0 0.0
        %876 = vmatprep.subr.mxu0 0.0
        %877 = vmatpush1.msra.mxu0 0.0
        %878 = vmatprep.subr.mxu0 0.0
        %879 = vmatpush1.msra.mxu0 0.0
        %880 = vmatprep.subr.mxu0 0.0
        %881 = vmatpush1.msra.mxu0 0.0
        %882 = vmatprep.subr.mxu0 0.0
        %883 = vmatpush1.msra.mxu0 0.0
        %884 = vmatprep.subr.mxu0 0.0
        %885 = vmatpush1.msra.mxu0 0.0
        %886 = vmatprep.subr.mxu0 0.0
        %887 = vmatpush1.msra.mxu0 0.0
        %888 = vmatprep.subr.mxu0 0.0
        %889 = vmatpush1.msra.mxu0 0.0
        %890 = vmatprep.subr.mxu0 0.0
        %891 = vmatpush1.msra.mxu0 0.0
        %892 = vmatprep.subr.mxu0 0.0
        %893 = vmatpush1.msra.mxu0 0.0
        %894 = vmatprep.subr.mxu0 0.0
        %895 = vmatpush1.msra.mxu0 0.0
        %896 = vmatprep.subr.mxu0 0.0
        %897 = vmatpush1.msra.mxu0 0.0
        %898 = vmatprep.subr.mxu0 0.0
        %899 = vmatpush1.msra.mxu0 0.0
        %900 = vmatprep.subr.mxu0 0.0
        %901 = vmatpush1.msra.mxu0 0.0
        %902 = vmatprep.subr.mxu0 0.0
        %903 = vmatpush1.msra.mxu0 0.0
        %904 = vmatprep.subr.mxu0 0.0
        %905 = vmatpush1.msra.mxu0 0.0
        %906 = vmatprep.mubr.f32.mxu0 0.0
        %907 = vmatmul.mubr.f32.gmra.mrb[0].mxu0 %v837
        %v908 = vpop.f32.mrb[0].mxu0
        %v909 = vadd.f32 0.0, %v908
        %v910 = vpop.f32.mrb[0].mxu0
        %v911 = vadd.f32 0.0, %v910
        %912 = vdwg.mxu0
        %913 = vmatprep.subr.mxu0 0.0
        %914 = vmatpush1.msra.mxu0 %v417
        %915 = vmatprep.subr.mxu0 0.0
        %916 = vmatpush1.msra.mxu0 %v420
        %917 = vmatprep.subr.mxu0 0.0
        %918 = vmatpush1.msra.mxu0 %v423
        %919 = vmatprep.subr.mxu0 0.0
        %920 = vmatpush1.msra.mxu0 %v426
        %921 = vmatprep.subr.mxu0 0.0
        %922 = vmatpush1.msra.mxu0 %v429
        %923 = vmatprep.subr.mxu0 0.0
        %924 = vmatpush1.msra.mxu0 %v432
        %925 = vmatprep.subr.mxu0 0.0
        %926 = vmatpush1.msra.mxu0 %v435
        %927 = vmatprep.subr.mxu0 0.0
        %928 = vmatpush1.msra.mxu0 %v438
        %929 = vmatprep.subr.mxu0 0.0
        %930 = vmatpush1.msra.mxu0 %v441
        %931 = vmatprep.subr.mxu0 0.0
        %932 = vmatpush1.msra.mxu0 %v444
        %933 = vmatprep.subr.mxu0 0.0
        %934 = vmatpush1.msra.mxu0 %v447
        %935 = vmatprep.subr.mxu0 0.0
        %936 = vmatpush1.msra.mxu0 %v450
        %937 = vmatprep.subr.mxu0 0.0
        %938 = vmatpush1.msra.mxu0 %v453
        %939 = vmatprep.subr.mxu0 0.0
        %940 = vmatpush1.msra.mxu0 %v456
        %941 = vmatprep.subr.mxu0 0.0
        %942 = vmatpush1.msra.mxu0 %v459
        %943 = vmatprep.subr.mxu0 0.0
        %944 = vmatpush1.msra.mxu0 %v462
        %945 = vmatprep.subr.mxu0 0.0
        %946 = vmatpush1.msra.mxu0 0.0
        %947 = vmatprep.subr.mxu0 0.0
        %948 = vmatpush1.msra.mxu0 0.0
        %949 = vmatprep.subr.mxu0 0.0
        %950 = vmatpush1.msra.mxu0 0.0
        %951 = vmatprep.subr.mxu0 0.0
        %952 = vmatpush1.msra.mxu0 0.0
        %953 = vmatprep.subr.mxu0 0.0
        %954 = vmatpush1.msra.mxu0 0.0
        %955 = vmatprep.subr.mxu0 0.0
        %956 = vmatpush1.msra.mxu0 0.0
        %957 = vmatprep.subr.mxu0 0.0
        %958 = vmatpush1.msra.mxu0 0.0
        %959 = vmatprep.subr.mxu0 0.0
        %960 = vmatpush1.msra.mxu0 0.0
        %961 = vmatprep.subr.mxu0 0.0
        %962 = vmatpush1.msra.mxu0 0.0
        %963 = vmatprep.subr.mxu0 0.0
        %964 = vmatpush1.msra.mxu0 0.0
        %965 = vmatprep.subr.mxu0 0.0
        %966 = vmatpush1.msra.mxu0 0.0
        %967 = vmatprep.subr.mxu0 0.0
        %968 = vmatpush1.msra.mxu0 0.0
        %969 = vmatprep.subr.mxu0 0.0
        %970 = vmatpush1.msra.mxu0 0.0
        %971 = vmatprep.subr.mxu0 0.0
        %972 = vmatpush1.msra.mxu0 0.0
        %973 = vmatprep.subr.mxu0 0.0
        %974 = vmatpush1.msra.mxu0 0.0
        %975 = vmatprep.subr.mxu0 0.0
        %976 = vmatpush1.msra.mxu0 0.0
        %977 = vmatprep.mubr.f32.mxu0 0.0
        %978 = vmatmul.mubr.f32.gmra.mrb[0].mxu0 %v837
        %v979 = vpop.f32.mrb[0].mxu0
        %v980 = vadd.f32 0.0, %v979
        %v981 = vpop.f32.mrb[0].mxu0
        %982 = vdwg.mxu0
        %v983 = vadd.f32 %v839, %v909
        %v984 = vxor.u32 %v983, 2147483648
        %v985 = vmul.f32 %v984, 1.442695
        %v986 = vpow.pop %v985
        %v987 = vadd.f32 %v986, 1.0
        %v988 = vrcp.pop %v987
        %v989 = vmul.f32 1.0, %v988
        %v990 = vadd.f32 %v840, %v911
        %v991 = vxor.u32 %v990, 2147483648
        %v992 = vmul.f32 %v991, 1.442695
        %v993 = vpow.pop %v992
        %v994 = vadd.f32 %v993, 1.0
        %v995 = vrcp.pop %v994
        %v996 = vmul.f32 1.0, %v995
        %v997 = vadd.f32 %v980, %v468
        %v998 = vmul.f32 %v989, %v997
        %v999 = vadd.f32 %v841, %v998
        %v1000 = vtanh.pop %v999
        %v1001 = vsub.f32 1.0, %v996
        %v1002 = vmul.f32 %v1001, %v1000
        %v1003 = vmul.f32 %v996, %v837
        %v1004 = vadd.f32 %v1002, %v1003
        %s1005 = scalar_lea.vmem %s399, 16
        %v1006 = vld [vmem:[%s1005] sm:$0xff]
        %1008 = vset.pattern.permute.xlu0 0
        %1009 = vperm.xlu0 %1008, %v1006
        %v1010 = vpop.permute.xlu0 %1009
        %v1012 = vmul.f32 %v1010, %v1004
        %s1013 = scalar_lea.vmem %s382, 16 [#allocation8]
        %1014 = vst [vmem:[%s1013] sm:$0xff] %v1012
        %v1015 = vsub.f32 1.0, %v1006
        %1017 = vset.pattern.permute.xlu0 0
        %1018 = vperm.xlu0 %1017, %v1015
        %v1019 = vpop.permute.xlu0 %1018
        %v1021 = vmul.f32 %v1019, %v837
        %v1022 = vadd.f32 %v1012, %v1021
        %s1023 = scalar_lea.vmem %s326, 72 [#allocation3]
        %v1024 = vld [vmem:[%s1023] sm:$0xff]
        %v1025 = vld [vmem:[%s1023 + $0x8] sm:$0xff]
        %v1026 = vld [vmem:[%s1023 + $0x10] sm:$0xff]
        %1027 = vmatprep.subr.mxu0 %v416
        %1028 = vmatpush1.msra.mxu0 %v415
        %1029 = vmatprep.subr.mxu0 %v419
        %1030 = vmatpush1.msra.mxu0 %v418
        %1031 = vmatprep.subr.mxu0 %v422
        %1032 = vmatpush1.msra.mxu0 %v421
        %1033 = vmatprep.subr.mxu0 %v425
        %1034 = vmatpush1.msra.mxu0 %v424
        %1035 = vmatprep.subr.mxu0 %v428
        %1036 = vmatpush1.msra.mxu0 %v427
        %1037 = vmatprep.subr.mxu0 %v431
        %1038 = vmatpush1.msra.mxu0 %v430
        %1039 = vmatprep.subr.mxu0 %v434
        %1040 = vmatpush1.msra.mxu0 %v433
        %1041 = vmatprep.subr.mxu0 %v437
        %1042 = vmatpush1.msra.mxu0 %v436
        %1043 = vmatprep.subr.mxu0 %v440
        %1044 = vmatpush1.msra.mxu0 %v439
        %1045 = vmatprep.subr.mxu0 %v443
        %1046 = vmatpush1.msra.mxu0 %v442
        %1047 = vmatprep.subr.mxu0 %v446
        %1048 = vmatpush1.msra.mxu0 %v445
        %1049 = vmatprep.subr.mxu0 %v449
        %1050 = vmatpush1.msra.mxu0 %v448
        %1051 = vmatprep.subr.mxu0 %v452
        %1052 = vmatpush1.msra.mxu0 %v451
        %1053 = vmatprep.subr.mxu0 %v455
        %1054 = vmatpush1.msra.mxu0 %v454
        %1055 = vmatprep.subr.mxu0 %v458
        %1056 = vmatpush1.msra.mxu0 %v457
        %1057 = vmatprep.subr.mxu0 %v461
        %1058 = vmatpush1.msra.mxu0 %v460
        %1059 = vmatprep.subr.mxu0 0.0
        %1060 = vmatpush1.msra.mxu0 0.0
        %1061 = vmatprep.subr.mxu0 0.0
        %1062 = vmatpush1.msra.mxu0 0.0
        %1063 = vmatprep.subr.mxu0 0.0
        %1064 = vmatpush1.msra.mxu0 0.0
        %1065 = vmatprep.subr.mxu0 0.0
        %1066 = vmatpush1.msra.mxu0 0.0
        %1067 = vmatprep.subr.mxu0 0.0
        %1068 = vmatpush1.msra.mxu0 0.0
        %1069 = vmatprep.subr.mxu0 0.0
        %1070 = vmatpush1.msra.mxu0 0.0
        %1071 = vmatprep.subr.mxu0 0.0
        %1072 = vmatpush1.msra.mxu0 0.0
        %1073 = vmatprep.subr.mxu0 0.0
        %1074 = vmatpush1.msra.mxu0 0.0
        %1075 = vmatprep.subr.mxu0 0.0
        %1076 = vmatpush1.msra.mxu0 0.0
        %1077 = vmatprep.subr.mxu0 0.0
        %1078 = vmatpush1.msra.mxu0 0.0
        %1079 = vmatprep.subr.mxu0 0.0
        %1080 = vmatpush1.msra.mxu0 0.0
        %1081 = vmatprep.subr.mxu0 0.0
        %1082 = vmatpush1.msra.mxu0 0.0
        %1083 = vmatprep.subr.mxu0 0.0
        %1084 = vmatpush1.msra.mxu0 0.0
        %1085 = vmatprep.subr.mxu0 0.0
        %1086 = vmatpush1.msra.mxu0 0.0
        %1087 = vmatprep.subr.mxu0 0.0
        %1088 = vmatpush1.msra.mxu0 0.0
        %1089 = vmatprep.subr.mxu0 0.0
        %1090 = vmatpush1.msra.mxu0 0.0
        %1091 = vmatprep.mubr.f32.mxu0 0.0
        %1092 = vmatmul.mubr.f32.gmra.mrb[0].mxu0 %v1022
        %v1093 = vpop.f32.mrb[0].mxu0
        %v1094 = vadd.f32 0.0, %v1093
        %v1095 = vpop.f32.mrb[0].mxu0
        %v1096 = vadd.f32 0.0, %v1095
        %1097 = vdwg.mxu0
        %1098 = vmatprep.subr.mxu0 0.0
        %1099 = vmatpush1.msra.mxu0 %v417
        %1100 = vmatprep.subr.mxu0 0.0
        %1101 = vmatpush1.msra.mxu0 %v420
        %1102 = vmatprep.subr.mxu0 0.0
        %1103 = vmatpush1.msra.mxu0 %v423
        %1104 = vmatprep.subr.mxu0 0.0
        %1105 = vmatpush1.msra.mxu0 %v426
        %1106 = vmatprep.subr.mxu0 0.0
        %1107 = vmatpush1.msra.mxu0 %v429
        %1108 = vmatprep.subr.mxu0 0.0
        %1109 = vmatpush1.msra.mxu0 %v432
        %1110 = vmatprep.subr.mxu0 0.0
        %1111 = vmatpush1.msra.mxu0 %v435
        %1112 = vmatprep.subr.mxu0 0.0
        %1113 = vmatpush1.msra.mxu0 %v438
        %1114 = vmatprep.subr.mxu0 0.0
        %1115 = vmatpush1.msra.mxu0 %v441
        %1116 = vmatprep.subr.mxu0 0.0
        %1117 = vmatpush1.msra.mxu0 %v444
        %1118 = vmatprep.subr.mxu0 0.0
        %1119 = vmatpush1.msra.mxu0 %v447
        %1120 = vmatprep.subr.mxu0 0.0
        %1121 = vmatpush1.msra.mxu0 %v450
        %1122 = vmatprep.subr.mxu0 0.0
        %1123 = vmatpush1.msra.mxu0 %v453
        %1124 = vmatprep.subr.mxu0 0.0
        %1125 = vmatpush1.msra.mxu0 %v456
        %1126 = vmatprep.subr.mxu0 0.0
        %1127 = vmatpush1.msra.mxu0 %v459
        %1128 = vmatprep.subr.mxu0 0.0
        %1129 = vmatpush1.msra.mxu0 %v462
        %1130 = vmatprep.subr.mxu0 0.0
        %1131 = vmatpush1.msra.mxu0 0.0
        %1132 = vmatprep.subr.mxu0 0.0
        %1133 = vmatpush1.msra.mxu0 0.0
        %1134 = vmatprep.subr.mxu0 0.0
        %1135 = vmatpush1.msra.mxu0 0.0
        %1136 = vmatprep.subr.mxu0 0.0
        %1137 = vmatpush1.msra.mxu0 0.0
        %1138 = vmatprep.subr.mxu0 0.0
        %1139 = vmatpush1.msra.mxu0 0.0
        %1140 = vmatprep.subr.mxu0 0.0
        %1141 = vmatpush1.msra.mxu0 0.0
        %1142 = vmatprep.subr.mxu0 0.0
        %1143 = vmatpush1.msra.mxu0 0.0
        %1144 = vmatprep.subr.mxu0 0.0
        %1145 = vmatpush1.msra.mxu0 0.0
        %1146 = vmatprep.subr.mxu0 0.0
        %1147 = vmatpush1.msra.mxu0 0.0
        %1148 = vmatprep.subr.mxu0 0.0
        %1149 = vmatpush1.msra.mxu0 0.0
        %1150 = vmatprep.subr.mxu0 0.0
        %1151 = vmatpush1.msra.mxu0 0.0
        %1152 = vmatprep.subr.mxu0 0.0
        %1153 = vmatpush1.msra.mxu0 0.0
        %1154 = vmatprep.subr.mxu0 0.0
        %1155 = vmatpush1.msra.mxu0 0.0
        %1156 = vmatprep.subr.mxu0 0.0
        %1157 = vmatpush1.msra.mxu0 0.0
        %1158 = vmatprep.subr.mxu0 0.0
        %1159 = vmatpush1.msra.mxu0 0.0
        %1160 = vmatprep.subr.mxu0 0.0
        %1161 = vmatpush1.msra.mxu0 0.0
        %1162 = vmatprep.mubr.f32.mxu0 0.0
        %1163 = vmatmul.mubr.f32.gmra.mrb[0].mxu0 %v1022
        %v1164 = vpop.f32.mrb[0].mxu0
        %v1165 = vadd.f32 0.0, %v1164
        %v1166 = vpop.f32.mrb[0].mxu0
        %1167 = vdwg.mxu0
        %v1168 = vadd.f32 %v1024, %v1094
        %v1169 = vxor.u32 %v1168, 2147483648
        %v1170 = vmul.f32 %v1169, 1.442695
        %v1171 = vpow.pop %v1170
        %v1172 = vadd.f32 %v1171, 1.0
        %v1173 = vrcp.pop %v1172
        %v1174 = vmul.f32 1.0, %v1173
        %v1175 = vadd.f32 %v1025, %v1096
        %v1176 = vxor.u32 %v1175, 2147483648
        %v1177 = vmul.f32 %v1176, 1.442695
        %v1178 = vpow.pop %v1177
        %v1179 = vadd.f32 %v1178, 1.0
        %v1180 = vrcp.pop %v1179
        %v1181 = vmul.f32 1.0, %v1180
        %v1182 = vadd.f32 %v1165, %v468
        %v1183 = vmul.f32 %v1174, %v1182
        %v1184 = vadd.f32 %v1026, %v1183
        %v1185 = vtanh.pop %v1184
        %v1186 = vsub.f32 1.0, %v1181
        %v1187 = vmul.f32 %v1186, %v1185
        %v1188 = vmul.f32 %v1181, %v1022
        %v1189 = vadd.f32 %v1187, %v1188
        %s1190 = scalar_lea.vmem %s399, 24
        %v1191 = vld [vmem:[%s1190] sm:$0xff]
        %1193 = vset.pattern.permute.xlu0 0
        %1194 = vperm.xlu0 %1193, %v1191
        %v1195 = vpop.permute.xlu0 %1194
        %v1197 = vmul.f32 %v1195, %v1189
        %s1198 = scalar_lea.vmem %s382, 24 [#allocation8]
        %1199 = vst [vmem:[%s1198] sm:$0xff] %v1197
        %v1200 = vsub.f32 1.0, %v1191
        %1202 = vset.pattern.permute.xlu0 0
        %1203 = vperm.xlu0 %1202, %v1200
        %v1204 = vpop.permute.xlu0 %1203
        %v1206 = vmul.f32 %v1204, %v1022
        %v1207 = vadd.f32 %v1197, %v1206
        %s1208 = scalar_lea.vmem %s326, 96 [#allocation3]
        %v1209 = vld [vmem:[%s1208] sm:$0xff]
        %v1210 = vld [vmem:[%s1208 + $0x8] sm:$0xff]
        %v1211 = vld [vmem:[%s1208 + $0x10] sm:$0xff]
        %1212 = vmatprep.subr.mxu0 %v416
        %1213 = vmatpush1.msra.mxu0 %v415
        %1214 = vmatprep.subr.mxu0 %v419
        %1215 = vmatpush1.msra.mxu0 %v418
        %1216 = vmatprep.subr.mxu0 %v422
        %1217 = vmatpush1.msra.mxu0 %v421
        %1218 = vmatprep.subr.mxu0 %v425
        %1219 = vmatpush1.msra.mxu0 %v424
        %1220 = vmatprep.subr.mxu0 %v428
        %1221 = vmatpush1.msra.mxu0 %v427
        %1222 = vmatprep.subr.mxu0 %v431
        %1223 = vmatpush1.msra.mxu0 %v430
        %1224 = vmatprep.subr.mxu0 %v434
        %1225 = vmatpush1.msra.mxu0 %v433
        %1226 = vmatprep.subr.mxu0 %v437
        %1227 = vmatpush1.msra.mxu0 %v436
        %1228 = vmatprep.subr.mxu0 %v440
        %1229 = vmatpush1.msra.mxu0 %v439
        %1230 = vmatprep.subr.mxu0 %v443
        %1231 = vmatpush1.msra.mxu0 %v442
        %1232 = vmatprep.subr.mxu0 %v446
        %1233 = vmatpush1.msra.mxu0 %v445
        %1234 = vmatprep.subr.mxu0 %v449
        %1235 = vmatpush1.msra.mxu0 %v448
        %1236 = vmatprep.subr.mxu0 %v452
        %1237 = vmatpush1.msra.mxu0 %v451
        %1238 = vmatprep.subr.mxu0 %v455
        %1239 = vmatpush1.msra.mxu0 %v454
        %1240 = vmatprep.subr.mxu0 %v458
        %1241 = vmatpush1.msra.mxu0 %v457
        %1242 = vmatprep.subr.mxu0 %v461
        %1243 = vmatpush1.msra.mxu0 %v460
        %1244 = vmatprep.subr.mxu0 0.0
        %1245 = vmatpush1.msra.mxu0 0.0
        %1246 = vmatprep.subr.mxu0 0.0
        %1247 = vmatpush1.msra.mxu0 0.0
        %1248 = vmatprep.subr.mxu0 0.0
        %1249 = vmatpush1.msra.mxu0 0.0
        %1250 = vmatprep.subr.mxu0 0.0
        %1251 = vmatpush1.msra.mxu0 0.0
        %1252 = vmatprep.subr.mxu0 0.0
        %1253 = vmatpush1.msra.mxu0 0.0
        %1254 = vmatprep.subr.mxu0 0.0
        %1255 = vmatpush1.msra.mxu0 0.0
        %1256 = vmatprep.subr.mxu0 0.0
        %1257 = vmatpush1.msra.mxu0 0.0
        %1258 = vmatprep.subr.mxu0 0.0
        %1259 = vmatpush1.msra.mxu0 0.0
        %1260 = vmatprep.subr.mxu0 0.0
        %1261 = vmatpush1.msra.mxu0 0.0
        %1262 = vmatprep.subr.mxu0 0.0
        %1263 = vmatpush1.msra.mxu0 0.0
        %1264 = vmatprep.subr.mxu0 0.0
        %1265 = vmatpush1.msra.mxu0 0.0
        %1266 = vmatprep.subr.mxu0 0.0
        %1267 = vmatpush1.msra.mxu0 0.0
        %1268 = vmatprep.subr.mxu0 0.0
        %1269 = vmatpush1.msra.mxu0 0.0
        %1270 = vmatprep.subr.mxu0 0.0
        %1271 = vmatpush1.msra.mxu0 0.0
        %1272 = vmatprep.subr.mxu0 0.0
        %1273 = vmatpush1.msra.mxu0 0.0
        %1274 = vmatprep.subr.mxu0 0.0
        %1275 = vmatpush1.msra.mxu0 0.0
        %1276 = vmatprep.mubr.f32.mxu0 0.0
        %1277 = vmatmul.mubr.f32.gmra.mrb[0].mxu0 %v1207
        %v1278 = vpop.f32.mrb[0].mxu0
        %v1279 = vadd.f32 0.0, %v1278
        %v1280 = vpop.f32.mrb[0].mxu0
        %v1281 = vadd.f32 0.0, %v1280
        %1282 = vdwg.mxu0
        %1283 = vmatprep.subr.mxu0 0.0
        %1284 = vmatpush1.msra.mxu0 %v417
        %1285 = vmatprep.subr.mxu0 0.0
        %1286 = vmatpush1.msra.mxu0 %v420
        %1287 = vmatprep.subr.mxu0 0.0
        %1288 = vmatpush1.msra.mxu0 %v423
        %1289 = vmatprep.subr.mxu0 0.0
        %1290 = vmatpush1.msra.mxu0 %v426
        %1291 = vmatprep.subr.mxu0 0.0
        %1292 = vmatpush1.msra.mxu0 %v429
        %1293 = vmatprep.subr.mxu0 0.0
        %1294 = vmatpush1.msra.mxu0 %v432
        %1295 = vmatprep.subr.mxu0 0.0
        %1296 = vmatpush1.msra.mxu0 %v435
        %1297 = vmatprep.subr.mxu0 0.0
        %1298 = vmatpush1.msra.mxu0 %v438
        %1299 = vmatprep.subr.mxu0 0.0
        %1300 = vmatpush1.msra.mxu0 %v441
        %1301 = vmatprep.subr.mxu0 0.0
        %1302 = vmatpush1.msra.mxu0 %v444
        %1303 = vmatprep.subr.mxu0 0.0
        %1304 = vmatpush1.msra.mxu0 %v447
        %1305 = vmatprep.subr.mxu0 0.0
        %1306 = vmatpush1.msra.mxu0 %v450
        %1307 = vmatprep.subr.mxu0 0.0
        %1308 = vmatpush1.msra.mxu0 %v453
        %1309 = vmatprep.subr.mxu0 0.0
        %1310 = vmatpush1.msra.mxu0 %v456
        %1311 = vmatprep.subr.mxu0 0.0
        %1312 = vmatpush1.msra.mxu0 %v459
        %1313 = vmatprep.subr.mxu0 0.0
        %1314 = vmatpush1.msra.mxu0 %v462
        %1315 = vmatprep.subr.mxu0 0.0
        %1316 = vmatpush1.msra.mxu0 0.0
        %1317 = vmatprep.subr.mxu0 0.0
        %1318 = vmatpush1.msra.mxu0 0.0
        %1319 = vmatprep.subr.mxu0 0.0
        %1320 = vmatpush1.msra.mxu0 0.0
        %1321 = vmatprep.subr.mxu0 0.0
        %1322 = vmatpush1.msra.mxu0 0.0
        %1323 = vmatprep.subr.mxu0 0.0
        %1324 = vmatpush1.msra.mxu0 0.0
        %1325 = vmatprep.subr.mxu0 0.0
        %1326 = vmatpush1.msra.mxu0 0.0
        %1327 = vmatprep.subr.mxu0 0.0
        %1328 = vmatpush1.msra.mxu0 0.0
        %1329 = vmatprep.subr.mxu0 0.0
        %1330 = vmatpush1.msra.mxu0 0.0
        %1331 = vmatprep.subr.mxu0 0.0
        %1332 = vmatpush1.msra.mxu0 0.0
        %1333 = vmatprep.subr.mxu0 0.0
        %1334 = vmatpush1.msra.mxu0 0.0
        %1335 = vmatprep.subr.mxu0 0.0
        %1336 = vmatpush1.msra.mxu0 0.0
        %1337 = vmatprep.subr.mxu0 0.0
        %1338 = vmatpush1.msra.mxu0 0.0
        %1339 = vmatprep.subr.mxu0 0.0
        %1340 = vmatpush1.msra.mxu0 0.0
        %1341 = vmatprep.subr.mxu0 0.0
        %1342 = vmatpush1.msra.mxu0 0.0
        %1343 = vmatprep.subr.mxu0 0.0
        %1344 = vmatpush1.msra.mxu0 0.0
        %1345 = vmatprep.subr.mxu0 0.0
        %1346 = vmatpush1.msra.mxu0 0.0
        %1347 = vmatprep.mubr.f32.mxu0 0.0
        %1348 = vmatmul.mubr.f32.gmra.mrb[0].mxu0 %v1207
        %v1349 = vpop.f32.mrb[0].mxu0
        %v1350 = vadd.f32 0.0, %v1349
        %v1351 = vpop.f32.mrb[0].mxu0
        %1352 = vdwg.mxu0
        %v1353 = vadd.f32 %v1209, %v1279
        %v1354 = vxor.u32 %v1353, 2147483648
        %v1355 = vmul.f32 %v1354, 1.442695
        %v1356 = vpow.pop %v1355
        %v1357 = vadd.f32 %v1356, 1.0
        %v1358 = vrcp.pop %v1357
        %v1359 = vmul.f32 1.0, %v1358
        %v1360 = vadd.f32 %v1210, %v1281
        %v1361 = vxor.u32 %v1360, 2147483648
        %v1362 = vmul.f32 %v1361, 1.442695
        %v1363 = vpow.pop %v1362
        %v1364 = vadd.f32 %v1363, 1.0
        %v1365 = vrcp.pop %v1364
        %v1366 = vmul.f32 1.0, %v1365
        %v1367 = vadd.f32 %v1350, %v468
        %v1368 = vmul.f32 %v1359, %v1367
        %v1369 = vadd.f32 %v1211, %v1368
        %v1370 = vtanh.pop %v1369
        %v1371 = vsub.f32 1.0, %v1366
        %v1372 = vmul.f32 %v1371, %v1370
        %v1373 = vmul.f32 %v1366, %v1207
        %v1374 = vadd.f32 %v1372, %v1373
        %s1375 = scalar_lea.vmem %s399, 32
        %v1376 = vld [vmem:[%s1375] sm:$0xff]
        %1378 = vset.pattern.permute.xlu0 0
        %1379 = vperm.xlu0 %1378, %v1376
        %v1380 = vpop.permute.xlu0 %1379
        %v1382 = vmul.f32 %v1380, %v1374
        %s1383 = scalar_lea.vmem %s382, 32 [#allocation8]
        %1384 = vst [vmem:[%s1383] sm:$0xff] %v1382
        %v1385 = vsub.f32 1.0, %v1376
        %1387 = vset.pattern.permute.xlu0 0
        %1388 = vperm.xlu0 %1387, %v1385
        %v1389 = vpop.permute.xlu0 %1388
        %v1391 = vmul.f32 %v1389, %v1207
        %v1392 = vadd.f32 %v1382, %v1391
        %s1393 = scalar_lea.vmem %s326, 120 [#allocation3]
        %v1394 = vld [vmem:[%s1393] sm:$0xff]
        %v1395 = vld [vmem:[%s1393 + $0x8] sm:$0xff]
        %v1396 = vld [vmem:[%s1393 + $0x10] sm:$0xff]
        %1397 = vmatprep.subr.mxu0 %v416
        %1398 = vmatpush1.msra.mxu0 %v415
        %1399 = vmatprep.subr.mxu0 %v419
        %1400 = vmatpush1.msra.mxu0 %v418
        %1401 = vmatprep.subr.mxu0 %v422
        %1402 = vmatpush1.msra.mxu0 %v421
        %1403 = vmatprep.subr.mxu0 %v425
        %1404 = vmatpush1.msra.mxu0 %v424
        %1405 = vmatprep.subr.mxu0 %v428
        %1406 = vmatpush1.msra.mxu0 %v427
        %1407 = vmatprep.subr.mxu0 %v431
        %1408 = vmatpush1.msra.mxu0 %v430
        %1409 = vmatprep.subr.mxu0 %v434
        %1410 = vmatpush1.msra.mxu0 %v433
        %1411 = vmatprep.subr.mxu0 %v437
        %1412 = vmatpush1.msra.mxu0 %v436
        %1413 = vmatprep.subr.mxu0 %v440
        %1414 = vmatpush1.msra.mxu0 %v439
        %1415 = vmatprep.subr.mxu0 %v443
        %1416 = vmatpush1.msra.mxu0 %v442
        %1417 = vmatprep.subr.mxu0 %v446
        %1418 = vmatpush1.msra.mxu0 %v445
        %1419 = vmatprep.subr.mxu0 %v449
        %1420 = vmatpush1.msra.mxu0 %v448
        %1421 = vmatprep.subr.mxu0 %v452
        %1422 = vmatpush1.msra.mxu0 %v451
        %1423 = vmatprep.subr.mxu0 %v455
        %1424 = vmatpush1.msra.mxu0 %v454
        %1425 = vmatprep.subr.mxu0 %v458
        %1426 = vmatpush1.msra.mxu0 %v457
        %1427 = vmatprep.subr.mxu0 %v461
        %1428 = vmatpush1.msra.mxu0 %v460
        %1429 = vmatprep.subr.mxu0 0.0
        %1430 = vmatpush1.msra.mxu0 0.0
        %1431 = vmatprep.subr.mxu0 0.0
        %1432 = vmatpush1.msra.mxu0 0.0
        %1433 = vmatprep.subr.mxu0 0.0
        %1434 = vmatpush1.msra.mxu0 0.0
        %1435 = vmatprep.subr.mxu0 0.0
        %1436 = vmatpush1.msra.mxu0 0.0
        %1437 = vmatprep.subr.mxu0 0.0
        %1438 = vmatpush1.msra.mxu0 0.0
        %1439 = vmatprep.subr.mxu0 0.0
        %1440 = vmatpush1.msra.mxu0 0.0
        %1441 = vmatprep.subr.mxu0 0.0
        %1442 = vmatpush1.msra.mxu0 0.0
        %1443 = vmatprep.subr.mxu0 0.0
        %1444 = vmatpush1.msra.mxu0 0.0
        %1445 = vmatprep.subr.mxu0 0.0
        %1446 = vmatpush1.msra.mxu0 0.0
        %1447 = vmatprep.subr.mxu0 0.0
        %1448 = vmatpush1.msra.mxu0 0.0
        %1449 = vmatprep.subr.mxu0 0.0
        %1450 = vmatpush1.msra.mxu0 0.0
        %1451 = vmatprep.subr.mxu0 0.0
        %1452 = vmatpush1.msra.mxu0 0.0
        %1453 = vmatprep.subr.mxu0 0.0
        %1454 = vmatpush1.msra.mxu0 0.0
        %1455 = vmatprep.subr.mxu0 0.0
        %1456 = vmatpush1.msra.mxu0 0.0
        %1457 = vmatprep.subr.mxu0 0.0
        %1458 = vmatpush1.msra.mxu0 0.0
        %1459 = vmatprep.subr.mxu0 0.0
        %1460 = vmatpush1.msra.mxu0 0.0
        %1461 = vmatprep.mubr.f32.mxu0 0.0
        %1462 = vmatmul.mubr.f32.gmra.mrb[0].mxu0 %v1392
        %v1463 = vpop.f32.mrb[0].mxu0
        %v1464 = vadd.f32 0.0, %v1463
        %v1465 = vpop.f32.mrb[0].mxu0
        %v1466 = vadd.f32 0.0, %v1465
        %1467 = vdwg.mxu0
        %1468 = vmatprep.subr.mxu0 0.0
        %1469 = vmatpush1.msra.mxu0 %v417
        %1470 = vmatprep.subr.mxu0 0.0
        %1471 = vmatpush1.msra.mxu0 %v420
        %1472 = vmatprep.subr.mxu0 0.0
        %1473 = vmatpush1.msra.mxu0 %v423
        %1474 = vmatprep.subr.mxu0 0.0
        %1475 = vmatpush1.msra.mxu0 %v426
        %1476 = vmatprep.subr.mxu0 0.0
        %1477 = vmatpush1.msra.mxu0 %v429
        %1478 = vmatprep.subr.mxu0 0.0
        %1479 = vmatpush1.msra.mxu0 %v432
        %1480 = vmatprep.subr.mxu0 0.0
        %1481 = vmatpush1.msra.mxu0 %v435
        %1482 = vmatprep.subr.mxu0 0.0
        %1483 = vmatpush1.msra.mxu0 %v438
        %1484 = vmatprep.subr.mxu0 0.0
        %1485 = vmatpush1.msra.mxu0 %v441
        %1486 = vmatprep.subr.mxu0 0.0
        %1487 = vmatpush1.msra.mxu0 %v444
        %1488 = vmatprep.subr.mxu0 0.0
        %1489 = vmatpush1.msra.mxu0 %v447
        %1490 = vmatprep.subr.mxu0 0.0
        %1491 = vmatpush1.msra.mxu0 %v450
        %1492 = vmatprep.subr.mxu0 0.0
        %1493 = vmatpush1.msra.mxu0 %v453
        %1494 = vmatprep.subr.mxu0 0.0
        %1495 = vmatpush1.msra.mxu0 %v456
        %1496 = vmatprep.subr.mxu0 0.0
        %1497 = vmatpush1.msra.mxu0 %v459
        %1498 = vmatprep.subr.mxu0 0.0
        %1499 = vmatpush1.msra.mxu0 %v462
        %1500 = vmatprep.subr.mxu0 0.0
        %1501 = vmatpush1.msra.mxu0 0.0
        %1502 = vmatprep.subr.mxu0 0.0
        %1503 = vmatpush1.msra.mxu0 0.0
        %1504 = vmatprep.subr.mxu0 0.0
        %1505 = vmatpush1.msra.mxu0 0.0
        %1506 = vmatprep.subr.mxu0 0.0
        %1507 = vmatpush1.msra.mxu0 0.0
        %1508 = vmatprep.subr.mxu0 0.0
        %1509 = vmatpush1.msra.mxu0 0.0
        %1510 = vmatprep.subr.mxu0 0.0
        %1511 = vmatpush1.msra.mxu0 0.0
        %1512 = vmatprep.subr.mxu0 0.0
        %1513 = vmatpush1.msra.mxu0 0.0
        %1514 = vmatprep.subr.mxu0 0.0
        %1515 = vmatpush1.msra.mxu0 0.0
        %1516 = vmatprep.subr.mxu0 0.0
        %1517 = vmatpush1.msra.mxu0 0.0
        %1518 = vmatprep.subr.mxu0 0.0
        %1519 = vmatpush1.msra.mxu0 0.0
        %1520 = vmatprep.subr.mxu0 0.0
        %1521 = vmatpush1.msra.mxu0 0.0
        %1522 = vmatprep.subr.mxu0 0.0
        %1523 = vmatpush1.msra.mxu0 0.0
        %1524 = vmatprep.subr.mxu0 0.0
        %1525 = vmatpush1.msra.mxu0 0.0
        %1526 = vmatprep.subr.mxu0 0.0
        %1527 = vmatpush1.msra.mxu0 0.0
        %1528 = vmatprep.subr.mxu0 0.0
        %1529 = vmatpush1.msra.mxu0 0.0
        %1530 = vmatprep.subr.mxu0 0.0
        %1531 = vmatpush1.msra.mxu0 0.0
        %1532 = vmatprep.mubr.f32.mxu0 0.0
        %1533 = vmatmul.mubr.f32.gmra.mrb[0].mxu0 %v1392
        %v1534 = vpop.f32.mrb[0].mxu0
        %v1535 = vadd.f32 0.0, %v1534
        %v1536 = vpop.f32.mrb[0].mxu0
        %1537 = vdwg.mxu0
        %v1538 = vadd.f32 %v1394, %v1464
        %v1539 = vxor.u32 %v1538, 2147483648
        %v1540 = vmul.f32 %v1539, 1.442695
        %v1541 = vpow.pop %v1540
        %v1542 = vadd.f32 %v1541, 1.0
        %v1543 = vrcp.pop %v1542
        %v1544 = vmul.f32 1.0, %v1543
        %v1545 = vadd.f32 %v1395, %v1466
        %v1546 = vxor.u32 %v1545, 2147483648
        %v1547 = vmul.f32 %v1546, 1.442695
        %v1548 = vpow.pop %v1547
        %v1549 = vadd.f32 %v1548, 1.0
        %v1550 = vrcp.pop %v1549
        %v1551 = vmul.f32 1.0, %v1550
        %v1552 = vadd.f32 %v1535, %v468
        %v1553 = vmul.f32 %v1544, %v1552
        %v1554 = vadd.f32 %v1396, %v1553
        %v1555 = vtanh.pop %v1554
        %v1556 = vsub.f32 1.0, %v1551
        %v1557 = vmul.f32 %v1556, %v1555
        %v1558 = vmul.f32 %v1551, %v1392
        %v1559 = vadd.f32 %v1557, %v1558
        %s1560 = scalar_lea.vmem %s399, 40
        %v1561 = vld [vmem:[%s1560] sm:$0xff]
        %1563 = vset.pattern.permute.xlu0 0
        %1564 = vperm.xlu0 %1563, %v1561
        %v1565 = vpop.permute.xlu0 %1564
        %v1567 = vmul.f32 %v1565, %v1559
        %s1568 = scalar_lea.vmem %s382, 40 [#allocation8]
        %1569 = vst [vmem:[%s1568] sm:$0xff] %v1567
        %v1570 = vsub.f32 1.0, %v1561
        %1572 = vset.pattern.permute.xlu0 0
        %1573 = vperm.xlu0 %1572, %v1570
        %v1574 = vpop.permute.xlu0 %1573
        %v1576 = vmul.f32 %v1574, %v1392
        %v1577 = vadd.f32 %v1567, %v1576
        %s1578 = scalar_lea.vmem %s326, 144 [#allocation3]
        %v1579 = vld [vmem:[%s1578] sm:$0xff]
        %v1580 = vld [vmem:[%s1578 + $0x8] sm:$0xff]
        %v1581 = vld [vmem:[%s1578 + $0x10] sm:$0xff]
        %1582 = vmatprep.subr.mxu0 %v416
        %1583 = vmatpush1.msra.mxu0 %v415
        %1584 = vmatprep.subr.mxu0 %v419
        %1585 = vmatpush1.msra.mxu0 %v418
        %1586 = vmatprep.subr.mxu0 %v422
        %1587 = vmatpush1.msra.mxu0 %v421
        %1588 = vmatprep.subr.mxu0 %v425
        %1589 = vmatpush1.msra.mxu0 %v424
        %1590 = vmatprep.subr.mxu0 %v428
        %1591 = vmatpush1.msra.mxu0 %v427
        %1592 = vmatprep.subr.mxu0 %v431
        %1593 = vmatpush1.msra.mxu0 %v430
        %1594 = vmatprep.subr.mxu0 %v434
        %1595 = vmatpush1.msra.mxu0 %v433
        %1596 = vmatprep.subr.mxu0 %v437
        %1597 = vmatpush1.msra.mxu0 %v436
        %1598 = vmatprep.subr.mxu0 %v440
        %1599 = vmatpush1.msra.mxu0 %v439
        %1600 = vmatprep.subr.mxu0 %v443
        %1601 = vmatpush1.msra.mxu0 %v442
        %1602 = vmatprep.subr.mxu0 %v446
        %1603 = vmatpush1.msra.mxu0 %v445
        %1604 = vmatprep.subr.mxu0 %v449
        %1605 = vmatpush1.msra.mxu0 %v448
        %1606 = vmatprep.subr.mxu0 %v452
        %1607 = vmatpush1.msra.mxu0 %v451
        %1608 = vmatprep.subr.mxu0 %v455
        %1609 = vmatpush1.msra.mxu0 %v454
        %1610 = vmatprep.subr.mxu0 %v458
        %1611 = vmatpush1.msra.mxu0 %v457
        %1612 = vmatprep.subr.mxu0 %v461
        %1613 = vmatpush1.msra.mxu0 %v460
        %1614 = vmatprep.subr.mxu0 0.0
        %1615 = vmatpush1.msra.mxu0 0.0
        %1616 = vmatprep.subr.mxu0 0.0
        %1617 = vmatpush1.msra.mxu0 0.0
        %1618 = vmatprep.subr.mxu0 0.0
        %1619 = vmatpush1.msra.mxu0 0.0
        %1620 = vmatprep.subr.mxu0 0.0
        %1621 = vmatpush1.msra.mxu0 0.0
        %1622 = vmatprep.subr.mxu0 0.0
        %1623 = vmatpush1.msra.mxu0 0.0
        %1624 = vmatprep.subr.mxu0 0.0
        %1625 = vmatpush1.msra.mxu0 0.0
        %1626 = vmatprep.subr.mxu0 0.0
        %1627 = vmatpush1.msra.mxu0 0.0
        %1628 = vmatprep.subr.mxu0 0.0
        %1629 = vmatpush1.msra.mxu0 0.0
        %1630 = vmatprep.subr.mxu0 0.0
        %1631 = vmatpush1.msra.mxu0 0.0
        %1632 = vmatprep.subr.mxu0 0.0
        %1633 = vmatpush1.msra.mxu0 0.0
        %1634 = vmatprep.subr.mxu0 0.0
        %1635 = vmatpush1.msra.mxu0 0.0
        %1636 = vmatprep.subr.mxu0 0.0
        %1637 = vmatpush1.msra.mxu0 0.0
        %1638 = vmatprep.subr.mxu0 0.0
        %1639 = vmatpush1.msra.mxu0 0.0
        %1640 = vmatprep.subr.mxu0 0.0
        %1641 = vmatpush1.msra.mxu0 0.0
        %1642 = vmatprep.subr.mxu0 0.0
        %1643 = vmatpush1.msra.mxu0 0.0
        %1644 = vmatprep.subr.mxu0 0.0
        %1645 = vmatpush1.msra.mxu0 0.0
        %1646 = vmatprep.mubr.f32.mxu0 0.0
        %1647 = vmatmul.mubr.f32.gmra.mrb[0].mxu0 %v1577
        %v1648 = vpop.f32.mrb[0].mxu0
        %v1649 = vadd.f32 0.0, %v1648
        %v1650 = vpop.f32.mrb[0].mxu0
        %v1651 = vadd.f32 0.0, %v1650
        %1652 = vdwg.mxu0
        %1653 = vmatprep.subr.mxu0 0.0
        %1654 = vmatpush1.msra.mxu0 %v417
        %1655 = vmatprep.subr.mxu0 0.0
        %1656 = vmatpush1.msra.mxu0 %v420
        %1657 = vmatprep.subr.mxu0 0.0
        %1658 = vmatpush1.msra.mxu0 %v423
        %1659 = vmatprep.subr.mxu0 0.0
        %1660 = vmatpush1.msra.mxu0 %v426
        %1661 = vmatprep.subr.mxu0 0.0
        %1662 = vmatpush1.msra.mxu0 %v429
        %1663 = vmatprep.subr.mxu0 0.0
        %1664 = vmatpush1.msra.mxu0 %v432
        %1665 = vmatprep.subr.mxu0 0.0
        %1666 = vmatpush1.msra.mxu0 %v435
        %1667 = vmatprep.subr.mxu0 0.0
        %1668 = vmatpush1.msra.mxu0 %v438
        %1669 = vmatprep.subr.mxu0 0.0
        %1670 = vmatpush1.msra.mxu0 %v441
        %1671 = vmatprep.subr.mxu0 0.0
        %1672 = vmatpush1.msra.mxu0 %v444
        %1673 = vmatprep.subr.mxu0 0.0
        %1674 = vmatpush1.msra.mxu0 %v447
        %1675 = vmatprep.subr.mxu0 0.0
        %1676 = vmatpush1.msra.mxu0 %v450
        %1677 = vmatprep.subr.mxu0 0.0
        %1678 = vmatpush1.msra.mxu0 %v453
        %1679 = vmatprep.subr.mxu0 0.0
        %1680 = vmatpush1.msra.mxu0 %v456
        %1681 = vmatprep.subr.mxu0 0.0
        %1682 = vmatpush1.msra.mxu0 %v459
        %1683 = vmatprep.subr.mxu0 0.0
        %1684 = vmatpush1.msra.mxu0 %v462
        %1685 = vmatprep.subr.mxu0 0.0
        %1686 = vmatpush1.msra.mxu0 0.0
        %1687 = vmatprep.subr.mxu0 0.0
        %1688 = vmatpush1.msra.mxu0 0.0
        %1689 = vmatprep.subr.mxu0 0.0
        %1690 = vmatpush1.msra.mxu0 0.0
        %1691 = vmatprep.subr.mxu0 0.0
        %1692 = vmatpush1.msra.mxu0 0.0
        %1693 = vmatprep.subr.mxu0 0.0
        %1694 = vmatpush1.msra.mxu0 0.0
        %1695 = vmatprep.subr.mxu0 0.0
        %1696 = vmatpush1.msra.mxu0 0.0
        %1697 = vmatprep.subr.mxu0 0.0
        %1698 = vmatpush1.msra.mxu0 0.0
        %1699 = vmatprep.subr.mxu0 0.0
        %1700 = vmatpush1.msra.mxu0 0.0
        %1701 = vmatprep.subr.mxu0 0.0
        %1702 = vmatpush1.msra.mxu0 0.0
        %1703 = vmatprep.subr.mxu0 0.0
        %1704 = vmatpush1.msra.mxu0 0.0
        %1705 = vmatprep.subr.mxu0 0.0
        %1706 = vmatpush1.msra.mxu0 0.0
        %1707 = vmatprep.subr.mxu0 0.0
        %1708 = vmatpush1.msra.mxu0 0.0
        %1709 = vmatprep.subr.mxu0 0.0
        %1710 = vmatpush1.msra.mxu0 0.0
        %1711 = vmatprep.subr.mxu0 0.0
        %1712 = vmatpush1.msra.mxu0 0.0
        %1713 = vmatprep.subr.mxu0 0.0
        %1714 = vmatpush1.msra.mxu0 0.0
        %1715 = vmatprep.subr.mxu0 0.0
        %1716 = vmatpush1.msra.mxu0 0.0
        %1717 = vmatprep.mubr.f32.mxu0 0.0
        %1718 = vmatmul.mubr.f32.gmra.mrb[0].mxu0 %v1577
        %v1719 = vpop.f32.mrb[0].mxu0
        %v1720 = vadd.f32 0.0, %v1719
        %v1721 = vpop.f32.mrb[0].mxu0
        %1722 = vdwg.mxu0
        %v1723 = vadd.f32 %v1579, %v1649
        %v1724 = vxor.u32 %v1723, 2147483648
        %v1725 = vmul.f32 %v1724, 1.442695
        %v1726 = vpow.pop %v1725
        %v1727 = vadd.f32 %v1726, 1.0
        %v1728 = vrcp.pop %v1727
        %v1729 = vmul.f32 1.0, %v1728
        %v1730 = vadd.f32 %v1580, %v1651
        %v1731 = vxor.u32 %v1730, 2147483648
        %v1732 = vmul.f32 %v1731, 1.442695
        %v1733 = vpow.pop %v1732
        %v1734 = vadd.f32 %v1733, 1.0
        %v1735 = vrcp.pop %v1734
        %v1736 = vmul.f32 1.0, %v1735
        %v1737 = vadd.f32 %v1720, %v468
        %v1738 = vmul.f32 %v1729, %v1737
        %v1739 = vadd.f32 %v1581, %v1738
        %v1740 = vtanh.pop %v1739
        %v1741 = vsub.f32 1.0, %v1736
        %v1742 = vmul.f32 %v1741, %v1740
        %v1743 = vmul.f32 %v1736, %v1577
        %v1744 = vadd.f32 %v1742, %v1743
        %s1745 = scalar_lea.vmem %s399, 48
        %v1746 = vld [vmem:[%s1745] sm:$0xff]
        %1748 = vset.pattern.permute.xlu0 0
        %1749 = vperm.xlu0 %1748, %v1746
        %v1750 = vpop.permute.xlu0 %1749
        %v1752 = vmul.f32 %v1750, %v1744
        %s1753 = scalar_lea.vmem %s382, 48 [#allocation8]
        %1754 = vst [vmem:[%s1753] sm:$0xff] %v1752
        %v1755 = vsub.f32 1.0, %v1746
        %1757 = vset.pattern.permute.xlu0 0
        %1758 = vperm.xlu0 %1757, %v1755
        %v1759 = vpop.permute.xlu0 %1758
        %v1761 = vmul.f32 %v1759, %v1577
        %v1762 = vadd.f32 %v1752, %v1761
        %s1763 = scalar_lea.vmem %s326, 168 [#allocation3]
        %v1764 = vld [vmem:[%s1763] sm:$0xff]
        %v1765 = vld [vmem:[%s1763 + $0x8] sm:$0xff]
        %v1766 = vld [vmem:[%s1763 + $0x10] sm:$0xff]
        %1767 = vmatprep.subr.mxu0 %v416
        %1768 = vmatpush1.msra.mxu0 %v415
        %1769 = vmatprep.subr.mxu0 %v419
        %1770 = vmatpush1.msra.mxu0 %v418
        %1771 = vmatprep.subr.mxu0 %v422
        %1772 = vmatpush1.msra.mxu0 %v421
        %1773 = vmatprep.subr.mxu0 %v425
        %1774 = vmatpush1.msra.mxu0 %v424
        %1775 = vmatprep.subr.mxu0 %v428
        %1776 = vmatpush1.msra.mxu0 %v427
        %1777 = vmatprep.subr.mxu0 %v431
        %1778 = vmatpush1.msra.mxu0 %v430
        %1779 = vmatprep.subr.mxu0 %v434
        %1780 = vmatpush1.msra.mxu0 %v433
        %1781 = vmatprep.subr.mxu0 %v437
        %1782 = vmatpush1.msra.mxu0 %v436
        %1783 = vmatprep.subr.mxu0 %v440
        %1784 = vmatpush1.msra.mxu0 %v439
        %1785 = vmatprep.subr.mxu0 %v443
        %1786 = vmatpush1.msra.mxu0 %v442
        %1787 = vmatprep.subr.mxu0 %v446
        %1788 = vmatpush1.msra.mxu0 %v445
        %1789 = vmatprep.subr.mxu0 %v449
        %1790 = vmatpush1.msra.mxu0 %v448
        %1791 = vmatprep.subr.mxu0 %v452
        %1792 = vmatpush1.msra.mxu0 %v451
        %1793 = vmatprep.subr.mxu0 %v455
        %1794 = vmatpush1.msra.mxu0 %v454
        %1795 = vmatprep.subr.mxu0 %v458
        %1796 = vmatpush1.msra.mxu0 %v457
        %1797 = vmatprep.subr.mxu0 %v461
        %1798 = vmatpush1.msra.mxu0 %v460
        %1799 = vmatprep.subr.mxu0 0.0
        %1800 = vmatpush1.msra.mxu0 0.0
        %1801 = vmatprep.subr.mxu0 0.0
        %1802 = vmatpush1.msra.mxu0 0.0
        %1803 = vmatprep.subr.mxu0 0.0
        %1804 = vmatpush1.msra.mxu0 0.0
        %1805 = vmatprep.subr.mxu0 0.0
        %1806 = vmatpush1.msra.mxu0 0.0
        %1807 = vmatprep.subr.mxu0 0.0
        %1808 = vmatpush1.msra.mxu0 0.0
        %1809 = vmatprep.subr.mxu0 0.0
        %1810 = vmatpush1.msra.mxu0 0.0
        %1811 = vmatprep.subr.mxu0 0.0
        %1812 = vmatpush1.msra.mxu0 0.0
        %1813 = vmatprep.subr.mxu0 0.0
        %1814 = vmatpush1.msra.mxu0 0.0
        %1815 = vmatprep.subr.mxu0 0.0
        %1816 = vmatpush1.msra.mxu0 0.0
        %1817 = vmatprep.subr.mxu0 0.0
        %1818 = vmatpush1.msra.mxu0 0.0
        %1819 = vmatprep.subr.mxu0 0.0
        %1820 = vmatpush1.msra.mxu0 0.0
        %1821 = vmatprep.subr.mxu0 0.0
        %1822 = vmatpush1.msra.mxu0 0.0
        %1823 = vmatprep.subr.mxu0 0.0
        %1824 = vmatpush1.msra.mxu0 0.0
        %1825 = vmatprep.subr.mxu0 0.0
        %1826 = vmatpush1.msra.mxu0 0.0
        %1827 = vmatprep.subr.mxu0 0.0
        %1828 = vmatpush1.msra.mxu0 0.0
        %1829 = vmatprep.subr.mxu0 0.0
        %1830 = vmatpush1.msra.mxu0 0.0
        %1831 = vmatprep.mubr.f32.mxu0 0.0
        %1832 = vmatmul.mubr.f32.gmra.mrb[0].mxu0 %v1762
        %v1833 = vpop.f32.mrb[0].mxu0
        %v1834 = vadd.f32 0.0, %v1833
        %v1835 = vpop.f32.mrb[0].mxu0
        %v1836 = vadd.f32 0.0, %v1835
        %1837 = vdwg.mxu0
        %1838 = vmatprep.subr.mxu0 0.0
        %1839 = vmatpush1.msra.mxu0 %v417
        %1840 = vmatprep.subr.mxu0 0.0
        %1841 = vmatpush1.msra.mxu0 %v420
        %1842 = vmatprep.subr.mxu0 0.0
        %1843 = vmatpush1.msra.mxu0 %v423
        %1844 = vmatprep.subr.mxu0 0.0
        %1845 = vmatpush1.msra.mxu0 %v426
        %1846 = vmatprep.subr.mxu0 0.0
        %1847 = vmatpush1.msra.mxu0 %v429
        %1848 = vmatprep.subr.mxu0 0.0
        %1849 = vmatpush1.msra.mxu0 %v432
        %1850 = vmatprep.subr.mxu0 0.0
        %1851 = vmatpush1.msra.mxu0 %v435
        %1852 = vmatprep.subr.mxu0 0.0
        %1853 = vmatpush1.msra.mxu0 %v438
        %1854 = vmatprep.subr.mxu0 0.0
        %1855 = vmatpush1.msra.mxu0 %v441
        %1856 = vmatprep.subr.mxu0 0.0
        %1857 = vmatpush1.msra.mxu0 %v444
        %1858 = vmatprep.subr.mxu0 0.0
        %1859 = vmatpush1.msra.mxu0 %v447
        %1860 = vmatprep.subr.mxu0 0.0
        %1861 = vmatpush1.msra.mxu0 %v450
        %1862 = vmatprep.subr.mxu0 0.0
        %1863 = vmatpush1.msra.mxu0 %v453
        %1864 = vmatprep.subr.mxu0 0.0
        %1865 = vmatpush1.msra.mxu0 %v456
        %1866 = vmatprep.subr.mxu0 0.0
        %1867 = vmatpush1.msra.mxu0 %v459
        %1868 = vmatprep.subr.mxu0 0.0
        %1869 = vmatpush1.msra.mxu0 %v462
        %1870 = vmatprep.subr.mxu0 0.0
        %1871 = vmatpush1.msra.mxu0 0.0
        %1872 = vmatprep.subr.mxu0 0.0
        %1873 = vmatpush1.msra.mxu0 0.0
        %1874 = vmatprep.subr.mxu0 0.0
        %1875 = vmatpush1.msra.mxu0 0.0
        %1876 = vmatprep.subr.mxu0 0.0
        %1877 = vmatpush1.msra.mxu0 0.0
        %1878 = vmatprep.subr.mxu0 0.0
        %1879 = vmatpush1.msra.mxu0 0.0
        %1880 = vmatprep.subr.mxu0 0.0
        %1881 = vmatpush1.msra.mxu0 0.0
        %1882 = vmatprep.subr.mxu0 0.0
        %1883 = vmatpush1.msra.mxu0 0.0
        %1884 = vmatprep.subr.mxu0 0.0
        %1885 = vmatpush1.msra.mxu0 0.0
        %1886 = vmatprep.subr.mxu0 0.0
        %1887 = vmatpush1.msra.mxu0 0.0
        %1888 = vmatprep.subr.mxu0 0.0
        %1889 = vmatpush1.msra.mxu0 0.0
        %1890 = vmatprep.subr.mxu0 0.0
        %1891 = vmatpush1.msra.mxu0 0.0
        %1892 = vmatprep.subr.mxu0 0.0
        %1893 = vmatpush1.msra.mxu0 0.0
        %1894 = vmatprep.subr.mxu0 0.0
        %1895 = vmatpush1.msra.mxu0 0.0
        %1896 = vmatprep.subr.mxu0 0.0
        %1897 = vmatpush1.msra.mxu0 0.0
        %1898 = vmatprep.subr.mxu0 0.0
        %1899 = vmatpush1.msra.mxu0 0.0
        %1900 = vmatprep.subr.mxu0 0.0
        %1901 = vmatpush1.msra.mxu0 0.0
        %1902 = vmatprep.mubr.f32.mxu0 0.0
        %1903 = vmatmul.mubr.f32.gmra.mrb[0].mxu0 %v1762
        %v1904 = vpop.f32.mrb[0].mxu0
        %v1905 = vadd.f32 0.0, %v1904
        %v1906 = vpop.f32.mrb[0].mxu0
        %1907 = vdwg.mxu0
        %v1908 = vadd.f32 %v1764, %v1834
        %v1909 = vxor.u32 %v1908, 2147483648
        %v1910 = vmul.f32 %v1909, 1.442695
        %v1911 = vpow.pop %v1910
        %v1912 = vadd.f32 %v1911, 1.0
        %v1913 = vrcp.pop %v1912
        %v1914 = vmul.f32 1.0, %v1913
        %v1915 = vadd.f32 %v1765, %v1836
        %v1916 = vxor.u32 %v1915, 2147483648
        %v1917 = vmul.f32 %v1916, 1.442695
        %v1918 = vpow.pop %v1917
        %v1919 = vadd.f32 %v1918, 1.0
        %v1920 = vrcp.pop %v1919
        %v1921 = vmul.f32 1.0, %v1920
        %v1922 = vadd.f32 %v1905, %v468
        %v1923 = vmul.f32 %v1914, %v1922
        %v1924 = vadd.f32 %v1766, %v1923
        %v1925 = vtanh.pop %v1924
        %v1926 = vsub.f32 1.0, %v1921
        %v1927 = vmul.f32 %v1926, %v1925
        %v1928 = vmul.f32 %v1921, %v1762
        %v1929 = vadd.f32 %v1927, %v1928
        %s1930 = scalar_lea.vmem %s399, 56
        %v1931 = vld [vmem:[%s1930] sm:$0xff]
        %1933 = vset.pattern.permute.xlu0 0
        %1934 = vperm.xlu0 %1933, %v1931
        %v1935 = vpop.permute.xlu0 %1934
        %v1937 = vmul.f32 %v1935, %v1929
        %s1938 = scalar_lea.vmem %s382, 56 [#allocation8]
        %1939 = vst [vmem:[%s1938] sm:$0xff] %v1937
        %v1940 = vsub.f32 1.0, %v1931
        %1942 = vset.pattern.permute.xlu0 0
        %1943 = vperm.xlu0 %1942, %v1940
        %v1944 = vpop.permute.xlu0 %1943
        %v1946 = vmul.f32 %v1944, %v1762
        %v1947 = vadd.f32 %v1937, %v1946
        %1948 = vst [vmem:[#allocation2] sm:$0xff] %v1947
        // Predicated region
        $region53: #{tpu_custom_call.1} parent=39 // pred_check
          %p1949 = pneg %p409
        $region54: #{tpu_custom_call.1} parent=39 // pred_check_branch
          %1951 = sbr.rel (%p1949) target = $region56
        $region55: #{tpu_custom_call.1} parent=39 // pred_region
          %1952 = vst [vmem:[%s389] sm:$0xff] %v1947
        $region56: #{tpu_custom_call.1} parent=39 // pred_fallthru
          _
        %s1953 = sand.u32 %s186, 1
        %s1954 = scalar_lea.sflag [#allocation5], %s1953
        %s1955 = sand.u32 %s186, 1
        %s1956 = smul.addr %s1955, 64
        %s1957 = scalar_lea.vmem [#allocation8], %s1956
        %s1958 = sand.u32 %s212, 1
        %s1959 = scalar_lea.sflag [#allocation10], %s1958
        %s1960 = sand.u32 %s212, 1
        %s1961 = smul.addr %s1960, 8
        %s1962 = scalar_lea.vmem [#allocation9], %s1961
        // Predicated region
        $region57: #{tpu_custom_call.1} parent=39 // pred_check
          %p1963 = pneg %p196
        $region58: #{tpu_custom_call.1} parent=39 // pred_check_branch
          %1965 = sbr.rel (%p1963) target = $region60
        $region59: #{tpu_custom_call.1} parent=39 // pred_region
          %s1966 = smul.u32 8, %s35
          %s1968 = ssub.s32 1024, 1024
          %1969 = vsyncadd %s1954, %s1968
          %s1970 = smul.addr %s34, 8
          %s1971 = sadd.s32 %s1966, %s1970
          %s1972 = smul.addr %s1971, 128
          %s1973 = scalar_lea.hbm %s5, %s1972
          %s1974 = sshll.u32 %s1957, 4
          %s1975 = int_to_ptr.vmem [resolvable:$true] %s1974
          %1980 = dma.vmem_to_hbm [thread:$0]  %s1975, 1024, %s1973, %s1954, 128, 128, 8
        $region60: #{tpu_custom_call.1} parent=39 // pred_fallthru
          _
        // Predicated region
        $region61: #{tpu_custom_call.1} parent=39 // pred_check
          %p1981 = pneg %p222
        $region62: #{tpu_custom_call.1} parent=39 // pred_check_branch
          %1983 = sbr.rel (%p1981) target = $region64
        $region63: #{tpu_custom_call.1} parent=39 // pred_region
          %s1985 = ssub.s32 128, 128
          %1986 = vsyncadd %s1959, %s1985
          %s1987 = smul.addr %s34, 128
          %s1988 = scalar_lea.hbm %s6, %s1987
          %s1990 = sshll.u32 %s1962, 4
          %s1991 = int_to_ptr.vmem [resolvable:$true] %s1990
          %1993 = dma.vmem_to_hbm [thread:$0]  %s1991, 128, %s1988, %s1959
        $region64: #{tpu_custom_call.1} parent=39 // pred_fallthru
          _
      $region40: #{tpu_custom_call.1} parent=5 // pred_fallthru
        _
      %p1994 = scmp.le.s32.totalorder 2, %s25
      // Predicated region
      $region65: #{tpu_custom_call.1} parent=5 // pred_check
        %p1995 = pneg %p1994
      $region66: #{tpu_custom_call.1} parent=5 // pred_check_branch
        %1997 = sbr.rel (%p1995) target = $region68
      $region67: #{tpu_custom_call.1} parent=5 // pred_region
        %s1998 = ssub.s32 %s25, 2
        // Predicated region
        $region69: #{tpu_custom_call.1} parent=67 // pred_check
          %p1999 = pneg %p202
        $region70: #{tpu_custom_call.1} parent=67 // pred_check_branch
          %2001 = sbr.rel (%p1999) target = $region72
        $region71: #{tpu_custom_call.1} parent=67 // pred_region
          %s2002 = sand.u32 %s187, 1
          %s2003 = scalar_lea.sflag [#allocation5], %s2002
          %s2004 = sand.u32 %s187, 1
          %s2005 = smul.addr %s2004, 64
          %s2006 = scalar_lea.vmem [#allocation8], %s2005
          %2007 = dma.done %s2003, 1024
        $region72: #{tpu_custom_call.1} parent=67 // pred_fallthru
          _
        // Predicated region
        $region73: #{tpu_custom_call.1} parent=67 // pred_check
          %p2008 = pneg %p228
        $region74: #{tpu_custom_call.1} parent=67 // pred_check_branch
          %2010 = sbr.rel (%p2008) target = $region76
        $region75: #{tpu_custom_call.1} parent=67 // pred_region
          %s2011 = sand.u32 %s213, 1
          %s2012 = scalar_lea.sflag [#allocation10], %s2011
          %s2013 = sand.u32 %s213, 1
          %s2014 = smul.addr %s2013, 8
          %s2015 = scalar_lea.vmem [#allocation9], %s2014
          %2016 = dma.done %s2012, 128
        $region76: #{tpu_custom_call.1} parent=67 // pred_fallthru
          _
      $region68: #{tpu_custom_call.1} parent=5 // pred_fallthru
        _
    $region6: #{tpu_custom_call.1} parent=1 // loop_footer
      %s29 = sadd.s32 1, %s25
    $region7: #{tpu_custom_call.1} parent=1 // loop_footer_branch
      %24 = sbr.rel target = $region3
    $region8: #{tpu_custom_call.1} parent=1 // loop_exit
      _
    %2017 = vsyncpa [#allocation4], 1
    %s2018 = scalar_lea.sflag [#allocation4], 1
    %2019 = vsyncpa %s2018, 1
    %2020 = vsyncpa [#allocation7], 1
    %s2021 = scalar_lea.sflag [#allocation7], 1
    %2022 = vsyncpa %s2021, 1
    %2023 = vsyncpa [#allocation5], 1
    %s2024 = scalar_lea.sflag [#allocation5], 1
    %2025 = vsyncpa %s2024, 1
    %2026 = vsyncpa [#allocation10], 1
    %s2027 = scalar_lea.sflag [#allocation10], 1
    %2028 = vsyncpa %s2027, 1

</llo_original>
